<compile_context>
chip_gen: v7x
topology: tpu7x:2x2x1
jax: 0.10.0
libtpu: 0.0.40
codegen_flags: <defaults>
</compile_context>

<pallas_src>
import functools
import math

import numpy as np
import jax
import jax.numpy as jnp
from jax.experimental import pallas as pl
from jax.experimental.pallas import tpu as pltpu


# ----------------------------------------------------------------------------
# Fused Pallas kernel: all LSTM layers + Linear(H,1)+ReLU epilogue
# ----------------------------------------------------------------------------
def fused_lstm_kernel(x_ref, wih0_ref, b0_ref, wih_r_ref, whh_ref, b_r_ref,
                      linw_ref, linb_ref, y_ref,
                      h_scr, c_scr, gx_scr, seq_scr, *,
                      num_layers, block_t, b_pad, hidden):
    """One grid step = one block of `block_t` timesteps through ALL layers.

    x_ref    : (Tb*Bp, IN)     padded input rows for this time block (row = t*Bp + b)
    wih0_ref : (IN, 4H)        layer-0 input->gate weights (resident)
    b0_ref   : (1, 4H)         layer-0 folded bias (b_ih + b_hh)
    wih_r_ref: (L-1|1, H, 4H)  input->gate weights for layers 1..L-1
    whh_ref  : (L, H, 4H)      hidden->gate weights, all layers
    b_r_ref  : (L-1|1, 1, 4H)  folded biases for layers 1..L-1
    linw_ref : (1, H), linb_ref: (1, 1)   final Linear(H, 1)
    y_ref    : (Bp, 1)         relu(Linear(h_last)) -- written on the last block
    h_scr/c_scr : (L, Bp, H)   VMEM: carried hidden/cell state per layer
    gx_scr      : (Tb*Bp, 4H)  VMEM: batched gate pre-activations (current layer)
    seq_scr     : (Tb*Bp, H)   VMEM: inter-layer activations for this time block
    """
    t_blk = pl.program_id(0)
    H = hidden
    Bp = b_pad

    @pl.when(t_blk == 0)
    def _():
        h_scr[...] = jnp.zeros_like(h_scr)
        c_scr[...] = jnp.zeros_like(c_scr)

    # Lane mask over the 4H gate axis (PyTorch gate order i|f|g|o, each H wide).
    lane = jax.lax.broadcasted_iota(jnp.int32, (Bp, 4 * H), 1)
    g_mask = (lane >= 2 * H) & (lane < 3 * H)
    scale = jnp.where(g_mask, jnp.float32(1.0), jnp.float32(0.5))  # hoisted

    def cell(gate_rows, h, c, whh):
        # gates: (Bp, 4H) -- one lane-dense vreg row block (4H == 128 here).
        gates = gate_rows + jnp.dot(h, whh, preferred_element_type=jnp.float32)
        # One full-vreg tanh: sigmoid(x) = 0.5*(tanh(x/2)+1) on i|f|o lanes,
        # plain tanh on the g lanes (scale 1.0).
        t_all = jnp.tanh(gates * scale)
        act = jnp.where(g_mask, t_all, 0.5 * (t_all + 1.0))
        i_g = act[:, 0 * H:1 * H]
        f_g = act[:, 1 * H:2 * H]
        g_g = act[:, 2 * H:3 * H]
        o_g = act[:, 3 * H:4 * H]
        c_new = f_g * c + i_g * g_g
        h_new = o_g * jnp.tanh(c_new)
        return h_new, c_new

    # ---- layer 0: fused batched input projection for this time block --------
    gx_scr[...] = (
        jnp.dot(x_ref[...], wih0_ref[...], preferred_element_type=jnp.float32)
        + b0_ref[...]
    )

    h = None
    for l in range(num_layers):
        if l > 0:
            # Batched projection of the previous layer's Tb outputs.
            gx_scr[...] = (
                jnp.dot(seq_scr[...], wih_r_ref[l - 1],
                        preferred_element_type=jnp.float32)
                + b_r_ref[l - 1]
            )
        whh_l = whh_ref[l]
        h = h_scr[l]
        c = c_scr[l]
        for t in range(block_t):          # Tb is small & static -> fully unrolled
            r0, r1 = t * Bp, (t + 1) * Bp
            h, c = cell(gx_scr[r0:r1, :], h, c, whh_l)
            if l < num_layers - 1:
                seq_scr[r0:r1, :] = h      # full (8, lane) tile store
        h_scr[l] = h
        c_scr[l] = c

    # ---- fused Linear(H, 1) + ReLU on the final hidden state of the top layer
    @pl.when(t_blk == pl.num_programs(0) - 1)
    def _():
        y = jnp.sum(h * linw_ref[...], axis=-1, keepdims=True) + linb_ref[...]
        y_ref[...] = jnp.maximum(y, 0.0)


# ----------------------------------------------------------------------------
# Wrapper
# ----------------------------------------------------------------------------
def lstm_forward(x, layer_params, lin_w, lin_b, hidden_size, block_t=None):
    """x: (T, B, IN) seq-first -> (B, 1) = relu(Linear(LSTM(x)[-1]))."""
    T, B, IN = x.shape
    H = hidden_size
    L = len(layer_params)

    # Pad batch rows to a sublane multiple so per-step accesses are full tiles.
    B_pad = max(8, ((B + 7) // 8) * 8)

    if block_t is None:
        block_t = T
    if T % block_t != 0:
        block_t = T            # fallback: a single full-extent time block
    block_rows = block_t * B_pad

    if B_pad != B:
        x = jnp.pad(x, ((0, 0), (0, B_pad - B), (0, 0)))  # padded rows -> zeros
    x2d = x.reshape(T * B_pad, IN)

    wih0_t, _, b0 = layer_params[0]
    # Stacked weights for layers >= 1 (dummy single slab keeps shapes static at L==1).
    if L > 1:
        wih_rest = jnp.stack([p[0] for p in layer_params[1:]])   # (L-1, H, 4H)
        b_rest = jnp.stack([p[2] for p in layer_params[1:]])     # (L-1, 1, 4H)
    else:
        wih_rest = jnp.zeros((1, H, 4 * H), jnp.float32)
        b_rest = jnp.zeros((1, 1, 4 * H), jnp.float32)
    whh_all = jnp.stack([p[1] for p in layer_params])             # (L, H, 4H)
    n_rest = wih_rest.shape[0]

    kernel = functools.partial(
        fused_lstm_kernel,
        num_layers=L, block_t=block_t, b_pad=B_pad, hidden=H,
    )

    y_pad = pl.pallas_call(
        kernel,
        out_shape=jax.ShapeDtypeStruct((B_pad, 1), jnp.float32),
        grid_spec=pltpu.PrefetchScalarGridSpec(
            num_scalar_prefetch=0,
            grid=(T // block_t,),
            in_specs=[
                pl.BlockSpec((block_rows, IN), lambda i: (i, 0)),        # x rows
                pl.BlockSpec((IN, 4 * H), lambda i: (0, 0)),             # W_ih0
                pl.BlockSpec((1, 4 * H), lambda i: (0, 0)),              # b0
                pl.BlockSpec((n_rest, H, 4 * H), lambda i: (0, 0, 0)),   # W_ih 1..L-1
                pl.BlockSpec((L, H, 4 * H), lambda i: (0, 0, 0)),        # W_hh all
                pl.BlockSpec((n_rest, 1, 4 * H), lambda i: (0, 0, 0)),   # b 1..L-1
                pl.BlockSpec((1, H), lambda i: (0, 0)),                  # lin_w
                pl.BlockSpec((1, 1), lambda i: (0, 0)),                  # lin_b
            ],
            out_specs=pl.BlockSpec((B_pad, 1), lambda i: (0, 0)),
            scratch_shapes=[
                pltpu.VMEM((L, B_pad, H), jnp.float32),        # h per layer
                pltpu.VMEM((L, B_pad, H), jnp.float32),        # c per layer
                pltpu.VMEM((block_rows, 4 * H), jnp.float32),  # gate pre-acts
                pltpu.VMEM((block_rows, H), jnp.float32),      # inter-layer seq
            ],
        ),
        compiler_params=pltpu.CompilerParams(
            dimension_semantics=("arbitrary",),   # time blocks carry h/c -> sequential
        ),
    )(x2d, wih0_t, b0, wih_rest, whh_all, b_rest, lin_w, lin_b)

    return y_pad[:B]


# ----------------------------------------------------------------------------
# Pure-JAX reference (for correctness check)
# ----------------------------------------------------------------------------
def lstm_forward_ref(x, layer_params, lin_w, lin_b, H):
    layer_in = x
    B = x.shape[1]
    for (wih_t, whh_t, bias) in layer_params:
        def step(carry, xt):
            h, c = carry
            gates = (xt @ wih_t + bias[0]) + h @ whh_t
            i = jax.nn.sigmoid(gates[:, 0 * H:1 * H])
            f = jax.nn.sigmoid(gates[:, 1 * H:2 * H])
            g = jnp.tanh(gates[:, 2 * H:3 * H])
            o = jax.nn.sigmoid(gates[:, 3 * H:4 * H])
            c = f * c + i * g
            h = o * jnp.tanh(c)
            return (h, c), h
        init = (jnp.zeros((B, H), jnp.float32), jnp.zeros((B, H), jnp.float32))
        _, outs = jax.lax.scan(step, init, layer_in)
        layer_in = outs
    last = layer_in[-1]
    return jnp.maximum(jnp.sum(last * lin_w, axis=-1, keepdims=True) + lin_b, 0.0)


# ----------------------------------------------------------------------------
# Main
# ----------------------------------------------------------------------------
if __name__ == "__main__":
    SEQ = 8          # time_step
    BATCH = 2
    NB_FEATURES = 4
    HIDDEN = 32
    NB_LAYERS = 2

    key = jax.random.PRNGKey(0)
    k_x, k_p = jax.random.split(key)

    # Input: (seq_len, batch, nb_features) -- seq-first, like nn.LSTM default.
    x = jax.random.normal(k_x, (SEQ, BATCH, NB_FEATURES), dtype=jnp.float32)

    # Deterministic parameter init mimicking PyTorch's U(-1/sqrt(H), 1/sqrt(H)).
    bound = 1.0 / math.sqrt(HIDDEN)
    layer_params = []
    pkeys = jax.random.split(k_p, NB_LAYERS * 4 + 2)
    for layer in range(NB_LAYERS):
        in_sz = NB_FEATURES if layer == 0 else HIDDEN
        kw1, kw2, kb1, kb2 = pkeys[4 * layer: 4 * layer + 4]
        w_ih = jax.random.uniform(kw1, (4 * HIDDEN, in_sz), jnp.float32, -bound, bound)
        w_hh = jax.random.uniform(kw2, (4 * HIDDEN, HIDDEN), jnp.float32, -bound, bound)
        b_ih = jax.random.uniform(kb1, (4 * HIDDEN,), jnp.float32, -bound, bound)
        b_hh = jax.random.uniform(kb2, (4 * HIDDEN,), jnp.float32, -bound, bound)
        # Pre-transpose weights, fold the two biases into one (1, 4H) row.
        layer_params.append(
            (jnp.asarray(w_ih.T), jnp.asarray(w_hh.T), (b_ih + b_hh)[None, :])
        )

    klw, klb = pkeys[-2], pkeys[-1]
    lin_w = jax.random.uniform(klw, (1, HIDDEN), jnp.float32, -bound, bound)
    lin_b = jax.random.uniform(klb, (1, 1), jnp.float32, -bound, bound)

    ref = jax.block_until_ready(lstm_forward_ref(x, layer_params, lin_w, lin_b, HIDDEN))

    # Primary (optimized) config: one time block => one grid step, one pallas_call.
    out = lstm_forward(x, layer_params, lin_w, lin_b, HIDDEN, block_t=SEQ)
    out = jax.block_until_ready(out)
    np.testing.assert_allclose(np.asarray(out), np.asarray(ref), rtol=2e-5, atol=2e-5)
    assert out.shape == (BATCH, 1)

    # Also exercise the multi-block cross-step h/c carry path.
    out2 = lstm_forward(x, layer_params, lin_w, lin_b, HIDDEN, block_t=4)
    out2 = jax.block_until_ready(out2)
    np.testing.assert_allclose(np.asarray(out2), np.asarray(ref), rtol=2e-5, atol=2e-5)

    print("KERNEL_OK")
</pallas_src>

<mosaic_0001>
module attributes {stable_mosaic.version = 11 : i64} {
  func.func @fused_lstm_kernel(%arg0: i32, %arg1: memref<64x4xf32, #tpu.memory_space<vmem>>, %arg2: memref<4x128xf32, #tpu.memory_space<vmem>>, %arg3: memref<1x128xf32, #tpu.memory_space<vmem>>, %arg4: memref<1x32x128xf32, #tpu.memory_space<vmem>>, %arg5: memref<2x32x128xf32, #tpu.memory_space<vmem>>, %arg6: memref<1x1x128xf32, #tpu.memory_space<vmem>>, %arg7: memref<1x32xf32, #tpu.memory_space<vmem>>, %arg8: memref<1x1xf32, #tpu.memory_space<vmem>>, %arg9: memref<8x1xf32, #tpu.memory_space<vmem>>, %arg10: memref<2x8x32xf32, #tpu.memory_space<vmem>>, %arg11: memref<2x8x32xf32, #tpu.memory_space<vmem>>, %arg12: memref<64x128xf32, #tpu.memory_space<vmem>>, %arg13: memref<64x32xf32, #tpu.memory_space<vmem>>) attributes {dimension_semantics = [#tpu.dimension_semantics<arbitrary>], iteration_bounds = array<i64: 1>, scalar_prefetch = 0 : i64, scratch_operands = 4 : i64, tpu.core_type = #tpu.core_type<tc>, window_params = [{transform_indices = @transform_0, window_bounds = array<i64: 64, 4>}, {pipeline_mode = #tpu.pipeline_mode<synchronous>, transform_indices = @transform_1, window_bounds = array<i64: 4, 128>}, {pipeline_mode = #tpu.pipeline_mode<synchronous>, transform_indices = @transform_2, window_bounds = array<i64: 1, 128>}, {pipeline_mode = #tpu.pipeline_mode<synchronous>, transform_indices = @transform_3, window_bounds = array<i64: 1, 32, 128>}, {pipeline_mode = #tpu.pipeline_mode<synchronous>, transform_indices = @transform_4, window_bounds = array<i64: 2, 32, 128>}, {pipeline_mode = #tpu.pipeline_mode<synchronous>, transform_indices = @transform_5, window_bounds = array<i64: 1, 1, 128>}, {pipeline_mode = #tpu.pipeline_mode<synchronous>, transform_indices = @transform_6, window_bounds = array<i64: 1, 32>}, {pipeline_mode = #tpu.pipeline_mode<synchronous>, transform_indices = @transform_7, window_bounds = array<i64: 1, 1>}, {pipeline_mode = #tpu.pipeline_mode<synchronous>, transform_indices = @transform_8, window_bounds = array<i64: 8, 1>}]} {
    %c0_i32 = arith.constant 0 : i32
    %0 = arith.cmpi eq, %arg0, %c0_i32 : i32
    %1 = arith.extui %0 : i1 to i32
    %c0_i32_0 = arith.constant 0 : i32
    %2 = arith.cmpi ne, %1, %c0_i32_0 : i32
    scf.if %2 {
      %cst_141 = arith.constant 0.000000e+00 : f32
      %367 = vector.broadcast %cst_141 : f32 to vector<2x8x32xf32>
      %c0_142 = arith.constant 0 : index
      %c0_143 = arith.constant 0 : index
      %c0_144 = arith.constant 0 : index
      %368 = vector.load %arg10[%c0_142, %c0_143, %c0_144] : memref<2x8x32xf32, #tpu.memory_space<vmem>>, vector<2x8x32xf32>
      tpu.vector_store %arg10[%c0_142, %c0_143, %c0_144], %367 {strides = array<i32>} : memref<2x8x32xf32, #tpu.memory_space<vmem>>, vector<2x8x32xf32>,
      %cst_145 = arith.constant 0.000000e+00 : f32
      %369 = vector.broadcast %cst_145 : f32 to vector<2x8x32xf32>
      %c0_146 = arith.constant 0 : index
      %c0_147 = arith.constant 0 : index
      %c0_148 = arith.constant 0 : index
      %370 = vector.load %arg11[%c0_146, %c0_147, %c0_148] : memref<2x8x32xf32, #tpu.memory_space<vmem>>, vector<2x8x32xf32>
      tpu.vector_store %arg11[%c0_146, %c0_147, %c0_148], %369 {strides = array<i32>} : memref<2x8x32xf32, #tpu.memory_space<vmem>>, vector<2x8x32xf32>,
    } else {
    }
    %3 = tpu.iota {dimensions = array<i32: 1>} : vector<8x128xi32>
    %c64_i32 = arith.constant 64 : i32
    %4 = vector.broadcast %c64_i32 : i32 to vector<8x128xi32>
    %5 = arith.cmpi sge, %3, %4 : vector<8x128xi32>
    %c96_i32 = arith.constant 96 : i32
    %6 = vector.broadcast %c96_i32 : i32 to vector<8x128xi32>
    %7 = arith.cmpi slt, %3, %6 : vector<8x128xi32>
    %8 = arith.andi %5, %7 : vector<8x128xi1>
    %cst = arith.constant 1.000000e+00 : f32
    %cst_1 = arith.constant 5.000000e-01 : f32
    %9 = vector.broadcast %cst : f32 to vector<8x128xf32>
    %10 = vector.broadcast %cst_1 : f32 to vector<8x128xf32>
    %11 = arith.select %8, %9, %10 : vector<8x128xi1>, vector<8x128xf32>
    %c0 = arith.constant 0 : index
    %c0_2 = arith.constant 0 : index
    %12 = vector.load %arg1[%c0, %c0_2] : memref<64x4xf32, #tpu.memory_space<vmem>>, vector<64x4xf32>
    %c0_3 = arith.constant 0 : index
    %c0_4 = arith.constant 0 : index
    %13 = vector.load %arg2[%c0_3, %c0_4] : memref<4x128xf32, #tpu.memory_space<vmem>>, vector<4x128xf32>
    %cst_5 = arith.constant dense<0.000000e+00> : vector<64x128xf32>
    %14 = tpu.matmul %12, %13, %cst_5 {dimension_numbers = #tpu.dot_dimension_numbers<[1], [0], [0], [1], [0, 0, 1, 1], [], []>} : vector<64x4xf32>, vector<4x128xf32>, vector<64x128xf32> -> vector<64x128xf32>
    %c0_6 = arith.constant 0 : index
    %c0_7 = arith.constant 0 : index
    %15 = vector.load %arg3[%c0_6, %c0_7] : memref<1x128xf32, #tpu.memory_space<vmem>>, vector<1x128xf32>
    %16 = vector.broadcast %15 : vector<1x128xf32> to vector<64x128xf32>
    %17 = arith.addf %14, %16 : vector<64x128xf32>
    %c0_8 = arith.constant 0 : index
    %c0_9 = arith.constant 0 : index
    %18 = vector.load %arg12[%c0_8, %c0_9] : memref<64x128xf32, #tpu.memory_space<vmem>>, vector<64x128xf32>
    tpu.vector_store %arg12[%c0_8, %c0_9], %17 {strides = array<i32>} : memref<64x128xf32, #tpu.memory_space<vmem>>, vector<64x128xf32>,
    %c0_10 = arith.constant 0 : index
    %c0_11 = arith.constant 0 : index
    %c0_12 = arith.constant 0 : index
    %19 = vector.load %arg5[%c0_10, %c0_11, %c0_12] : memref<2x32x128xf32, #tpu.memory_space<vmem>>, vector<1x32x128xf32>
    %20 = vector.shape_cast %19 : vector<1x32x128xf32> to vector<32x128xf32>
    %c0_13 = arith.constant 0 : index
    %c0_14 = arith.constant 0 : index
    %c0_15 = arith.constant 0 : index
    %21 = vector.load %arg10[%c0_13, %c0_14, %c0_15] : memref<2x8x32xf32, #tpu.memory_space<vmem>>, vector<1x8x32xf32>
    %22 = vector.shape_cast %21 : vector<1x8x32xf32> to vector<8x32xf32>
    %c0_16 = arith.constant 0 : index
    %c0_17 = arith.constant 0 : index
    %c0_18 = arith.constant 0 : index
    %23 = vector.load %arg11[%c0_16, %c0_17, %c0_18] : memref<2x8x32xf32, #tpu.memory_space<vmem>>, vector<1x8x32xf32>
    %24 = vector.shape_cast %23 : vector<1x8x32xf32> to vector<8x32xf32>
    %c0_19 = arith.constant 0 : index
    %c0_20 = arith.constant 0 : index
    %25 = vector.load %arg12[%c0_19, %c0_20] : memref<64x128xf32, #tpu.memory_space<vmem>>, vector<8x128xf32>
    %cst_21 = arith.constant dense<0.000000e+00> : vector<8x128xf32>
    %26 = tpu.matmul %22, %20, %cst_21 {dimension_numbers = #tpu.dot_dimension_numbers<[1], [0], [0], [1], [0, 0, 1, 1], [], []>} : vector<8x32xf32>, vector<32x128xf32>, vector<8x128xf32> -> vector<8x128xf32>
    %27 = arith.addf %25, %26 : vector<8x128xf32>
    %28 = arith.mulf %27, %11 : vector<8x128xf32>
    %29 = math.tanh %28 : vector<8x128xf32>
    %cst_22 = arith.constant 1.000000e+00 : f32
    %30 = vector.broadcast %cst_22 : f32 to vector<8x128xf32>
    %31 = arith.addf %29, %30 : vector<8x128xf32>
    %cst_23 = arith.constant 5.000000e-01 : f32
    %32 = vector.broadcast %cst_23 : f32 to vector<8x128xf32>
    %33 = arith.mulf %32, %31 : vector<8x128xf32>
    %34 = arith.select %8, %29, %33 : vector<8x128xi1>, vector<8x128xf32>
    %35 = vector.extract_strided_slice %34 {offsets = [0, 0], sizes = [8, 32], strides = [1, 1]} : vector<8x128xf32> to vector<8x32xf32>
    %36 = vector.extract_strided_slice %34 {offsets = [0, 32], sizes = [8, 32], strides = [1, 1]} : vector<8x128xf32> to vector<8x32xf32>
    %37 = vector.extract_strided_slice %34 {offsets = [0, 64], sizes = [8, 32], strides = [1, 1]} : vector<8x128xf32> to vector<8x32xf32>
    %38 = vector.extract_strided_slice %34 {offsets = [0, 96], sizes = [8, 32], strides = [1, 1]} : vector<8x128xf32> to vector<8x32xf32>
    %39 = arith.mulf %36, %24 : vector<8x32xf32>
    %40 = arith.mulf %35, %37 : vector<8x32xf32>
    %41 = arith.addf %39, %40 : vector<8x32xf32>
    %42 = math.tanh %41 : vector<8x32xf32>
    %43 = arith.mulf %38, %42 : vector<8x32xf32>
    %c0_24 = arith.constant 0 : index
    %c0_25 = arith.constant 0 : index
    %44 = vector.load %arg13[%c0_24, %c0_25] : memref<64x32xf32, #tpu.memory_space<vmem>>, vector<8x32xf32>
    tpu.vector_store %arg13[%c0_24, %c0_25], %43 {strides = array<i32>} : memref<64x32xf32, #tpu.memory_space<vmem>>, vector<8x32xf32>,
    %c8 = arith.constant 8 : index
    %c0_26 = arith.constant 0 : index
    %45 = vector.load %arg12[%c8, %c0_26] : memref<64x128xf32, #tpu.memory_space<vmem>>, vector<8x128xf32>
    %cst_27 = arith.constant dense<0.000000e+00> : vector<8x128xf32>
    %46 = tpu.matmul %43, %20, %cst_27 {dimension_numbers = #tpu.dot_dimension_numbers<[1], [0], [0], [1], [0, 0, 1, 1], [], []>} : vector<8x32xf32>, vector<32x128xf32>, vector<8x128xf32> -> vector<8x128xf32>
    %47 = arith.addf %45, %46 : vector<8x128xf32>
    %48 = arith.mulf %47, %11 : vector<8x128xf32>
    %49 = math.tanh %48 : vector<8x128xf32>
    %cst_28 = arith.constant 1.000000e+00 : f32
    %50 = vector.broadcast %cst_28 : f32 to vector<8x128xf32>
    %51 = arith.addf %49, %50 : vector<8x128xf32>
    %cst_29 = arith.constant 5.000000e-01 : f32
    %52 = vector.broadcast %cst_29 : f32 to vector<8x128xf32>
    %53 = arith.mulf %52, %51 : vector<8x128xf32>
    %54 = arith.select %8, %49, %53 : vector<8x128xi1>, vector<8x128xf32>
    %55 = vector.extract_strided_slice %54 {offsets = [0, 0], sizes = [8, 32], strides = [1, 1]} : vector<8x128xf32> to vector<8x32xf32>
    %56 = vector.extract_strided_slice %54 {offsets = [0, 32], sizes = [8, 32], strides = [1, 1]} : vector<8x128xf32> to vector<8x32xf32>
    %57 = vector.extract_strided_slice %54 {offsets = [0, 64], sizes = [8, 32], strides = [1, 1]} : vector<8x128xf32> to vector<8x32xf32>
    %58 = vector.extract_strided_slice %54 {offsets = [0, 96], sizes = [8, 32], strides = [1, 1]} : vector<8x128xf32> to vector<8x32xf32>
    %59 = arith.mulf %56, %41 : vector<8x32xf32>
    %60 = arith.mulf %55, %57 : vector<8x32xf32>
    %61 = arith.addf %59, %60 : vector<8x32xf32>
    %62 = math.tanh %61 : vector<8x32xf32>
    %63 = arith.mulf %58, %62 : vector<8x32xf32>
    %c8_30 = arith.constant 8 : index
    %c0_31 = arith.constant 0 : index
    %64 = vector.load %arg13[%c8_30, %c0_31] : memref<64x32xf32, #tpu.memory_space<vmem>>, vector<8x32xf32>
    tpu.vector_store %arg13[%c8_30, %c0_31], %63 {strides = array<i32>} : memref<64x32xf32, #tpu.memory_space<vmem>>, vector<8x32xf32>,
    %c16 = arith.constant 16 : index
    %c0_32 = arith.constant 0 : index
    %65 = vector.load %arg12[%c16, %c0_32] : memref<64x128xf32, #tpu.memory_space<vmem>>, vector<8x128xf32>
    %cst_33 = arith.constant dense<0.000000e+00> : vector<8x128xf32>
    %66 = tpu.matmul %63, %20, %cst_33 {dimension_numbers = #tpu.dot_dimension_numbers<[1], [0], [0], [1], [0, 0, 1, 1], [], []>} : vector<8x32xf32>, vector<32x128xf32>, vector<8x128xf32> -> vector<8x128xf32>
    %67 = arith.addf %65, %66 : vector<8x128xf32>
    %68 = arith.mulf %67, %11 : vector<8x128xf32>
    %69 = math.tanh %68 : vector<8x128xf32>
    %cst_34 = arith.constant 1.000000e+00 : f32
    %70 = vector.broadcast %cst_34 : f32 to vector<8x128xf32>
    %71 = arith.addf %69, %70 : vector<8x128xf32>
    %cst_35 = arith.constant 5.000000e-01 : f32
    %72 = vector.broadcast %cst_35 : f32 to vector<8x128xf32>
    %73 = arith.mulf %72, %71 : vector<8x128xf32>
    %74 = arith.select %8, %69, %73 : vector<8x128xi1>, vector<8x128xf32>
    %75 = vector.extract_strided_slice %74 {offsets = [0, 0], sizes = [8, 32], strides = [1, 1]} : vector<8x128xf32> to vector<8x32xf32>
    %76 = vector.extract_strided_slice %74 {offsets = [0, 32], sizes = [8, 32], strides = [1, 1]} : vector<8x128xf32> to vector<8x32xf32>
    %77 = vector.extract_strided_slice %74 {offsets = [0, 64], sizes = [8, 32], strides = [1, 1]} : vector<8x128xf32> to vector<8x32xf32>
    %78 = vector.extract_strided_slice %74 {offsets = [0, 96], sizes = [8, 32], strides = [1, 1]} : vector<8x128xf32> to vector<8x32xf32>
    %79 = arith.mulf %76, %61 : vector<8x32xf32>
    %80 = arith.mulf %75, %77 : vector<8x32xf32>
    %81 = arith.addf %79, %80 : vector<8x32xf32>
    %82 = math.tanh %81 : vector<8x32xf32>
    %83 = arith.mulf %78, %82 : vector<8x32xf32>
    %c16_36 = arith.constant 16 : index
    %c0_37 = arith.constant 0 : index
    %84 = vector.load %arg13[%c16_36, %c0_37] : memref<64x32xf32, #tpu.memory_space<vmem>>, vector<8x32xf32>
    tpu.vector_store %arg13[%c16_36, %c0_37], %83 {strides = array<i32>} : memref<64x32xf32, #tpu.memory_space<vmem>>, vector<8x32xf32>,
    %c24 = arith.constant 24 : index
    %c0_38 = arith.constant 0 : index
    %85 = vector.load %arg12[%c24, %c0_38] : memref<64x128xf32, #tpu.memory_space<vmem>>, vector<8x128xf32>
    %cst_39 = arith.constant dense<0.000000e+00> : vector<8x128xf32>
    %86 = tpu.matmul %83, %20, %cst_39 {dimension_numbers = #tpu.dot_dimension_numbers<[1], [0], [0], [1], [0, 0, 1, 1], [], []>} : vector<8x32xf32>, vector<32x128xf32>, vector<8x128xf32> -> vector<8x128xf32>
    %87 = arith.addf %85, %86 : vector<8x128xf32>
    %88 = arith.mulf %87, %11 : vector<8x128xf32>
    %89 = math.tanh %88 : vector<8x128xf32>
    %cst_40 = arith.constant 1.000000e+00 : f32
    %90 = vector.broadcast %cst_40 : f32 to vector<8x128xf32>
    %91 = arith.addf %89, %90 : vector<8x128xf32>
    %cst_41 = arith.constant 5.000000e-01 : f32
    %92 = vector.broadcast %cst_41 : f32 to vector<8x128xf32>
    %93 = arith.mulf %92, %91 : vector<8x128xf32>
    %94 = arith.select %8, %89, %93 : vector<8x128xi1>, vector<8x128xf32>
    %95 = vector.extract_strided_slice %94 {offsets = [0, 0], sizes = [8, 32], strides = [1, 1]} : vector<8x128xf32> to vector<8x32xf32>
    %96 = vector.extract_strided_slice %94 {offsets = [0, 32], sizes = [8, 32], strides = [1, 1]} : vector<8x128xf32> to vector<8x32xf32>
    %97 = vector.extract_strided_slice %94 {offsets = [0, 64], sizes = [8, 32], strides = [1, 1]} : vector<8x128xf32> to vector<8x32xf32>
    %98 = vector.extract_strided_slice %94 {offsets = [0, 96], sizes = [8, 32], strides = [1, 1]} : vector<8x128xf32> to vector<8x32xf32>
    %99 = arith.mulf %96, %81 : vector<8x32xf32>
    %100 = arith.mulf %95, %97 : vector<8x32xf32>
    %101 = arith.addf %99, %100 : vector<8x32xf32>
    %102 = math.tanh %101 : vector<8x32xf32>
    %103 = arith.mulf %98, %102 : vector<8x32xf32>
    %c24_42 = arith.constant 24 : index
    %c0_43 = arith.constant 0 : index
    %104 = vector.load %arg13[%c24_42, %c0_43] : memref<64x32xf32, #tpu.memory_space<vmem>>, vector<8x32xf32>
    tpu.vector_store %arg13[%c24_42, %c0_43], %103 {strides = array<i32>} : memref<64x32xf32, #tpu.memory_space<vmem>>, vector<8x32xf32>,
    %c32 = arith.constant 32 : index
    %c0_44 = arith.constant 0 : index
    %105 = vector.load %arg12[%c32, %c0_44] : memref<64x128xf32, #tpu.memory_space<vmem>>, vector<8x128xf32>
    %cst_45 = arith.constant dense<0.000000e+00> : vector<8x128xf32>
    %106 = tpu.matmul %103, %20, %cst_45 {dimension_numbers = #tpu.dot_dimension_numbers<[1], [0], [0], [1], [0, 0, 1, 1], [], []>} : vector<8x32xf32>, vector<32x128xf32>, vector<8x128xf32> -> vector<8x128xf32>
    %107 = arith.addf %105, %106 : vector<8x128xf32>
    %108 = arith.mulf %107, %11 : vector<8x128xf32>
    %109 = math.tanh %108 : vector<8x128xf32>
    %cst_46 = arith.constant 1.000000e+00 : f32
    %110 = vector.broadcast %cst_46 : f32 to vector<8x128xf32>
    %111 = arith.addf %109, %110 : vector<8x128xf32>
    %cst_47 = arith.constant 5.000000e-01 : f32
    %112 = vector.broadcast %cst_47 : f32 to vector<8x128xf32>
    %113 = arith.mulf %112, %111 : vector<8x128xf32>
    %114 = arith.select %8, %109, %113 : vector<8x128xi1>, vector<8x128xf32>
    %115 = vector.extract_strided_slice %114 {offsets = [0, 0], sizes = [8, 32], strides = [1, 1]} : vector<8x128xf32> to vector<8x32xf32>
    %116 = vector.extract_strided_slice %114 {offsets = [0, 32], sizes = [8, 32], strides = [1, 1]} : vector<8x128xf32> to vector<8x32xf32>
    %117 = vector.extract_strided_slice %114 {offsets = [0, 64], sizes = [8, 32], strides = [1, 1]} : vector<8x128xf32> to vector<8x32xf32>
    %118 = vector.extract_strided_slice %114 {offsets = [0, 96], sizes = [8, 32], strides = [1, 1]} : vector<8x128xf32> to vector<8x32xf32>
    %119 = arith.mulf %116, %101 : vector<8x32xf32>
    %120 = arith.mulf %115, %117 : vector<8x32xf32>
    %121 = arith.addf %119, %120 : vector<8x32xf32>
    %122 = math.tanh %121 : vector<8x32xf32>
    %123 = arith.mulf %118, %122 : vector<8x32xf32>
    %c32_48 = arith.constant 32 : index
    %c0_49 = arith.constant 0 : index
    %124 = vector.load %arg13[%c32_48, %c0_49] : memref<64x32xf32, #tpu.memory_space<vmem>>, vector<8x32xf32>
    tpu.vector_store %arg13[%c32_48, %c0_49], %123 {strides = array<i32>} : memref<64x32xf32, #tpu.memory_space<vmem>>, vector<8x32xf32>,
    %c40 = arith.constant 40 : index
    %c0_50 = arith.constant 0 : index
    %125 = vector.load %arg12[%c40, %c0_50] : memref<64x128xf32, #tpu.memory_space<vmem>>, vector<8x128xf32>
    %cst_51 = arith.constant dense<0.000000e+00> : vector<8x128xf32>
    %126 = tpu.matmul %123, %20, %cst_51 {dimension_numbers = #tpu.dot_dimension_numbers<[1], [0], [0], [1], [0, 0, 1, 1], [], []>} : vector<8x32xf32>, vector<32x128xf32>, vector<8x128xf32> -> vector<8x128xf32>
    %127 = arith.addf %125, %126 : vector<8x128xf32>
    %128 = arith.mulf %127, %11 : vector<8x128xf32>
    %129 = math.tanh %128 : vector<8x128xf32>
    %cst_52 = arith.constant 1.000000e+00 : f32
    %130 = vector.broadcast %cst_52 : f32 to vector<8x128xf32>
    %131 = arith.addf %129, %130 : vector<8x128xf32>
    %cst_53 = arith.constant 5.000000e-01 : f32
    %132 = vector.broadcast %cst_53 : f32 to vector<8x128xf32>
    %133 = arith.mulf %132, %131 : vector<8x128xf32>
    %134 = arith.select %8, %129, %133 : vector<8x128xi1>, vector<8x128xf32>
    %135 = vector.extract_strided_slice %134 {offsets = [0, 0], sizes = [8, 32], strides = [1, 1]} : vector<8x128xf32> to vector<8x32xf32>
    %136 = vector.extract_strided_slice %134 {offsets = [0, 32], sizes = [8, 32], strides = [1, 1]} : vector<8x128xf32> to vector<8x32xf32>
    %137 = vector.extract_strided_slice %134 {offsets = [0, 64], sizes = [8, 32], strides = [1, 1]} : vector<8x128xf32> to vector<8x32xf32>
    %138 = vector.extract_strided_slice %134 {offsets = [0, 96], sizes = [8, 32], strides = [1, 1]} : vector<8x128xf32> to vector<8x32xf32>
    %139 = arith.mulf %136, %121 : vector<8x32xf32>
    %140 = arith.mulf %135, %137 : vector<8x32xf32>
    %141 = arith.addf %139, %140 : vector<8x32xf32>
    %142 = math.tanh %141 : vector<8x32xf32>
    %143 = arith.mulf %138, %142 : vector<8x32xf32>
    %c40_54 = arith.constant 40 : index
    %c0_55 = arith.constant 0 : index
    %144 = vector.load %arg13[%c40_54, %c0_55] : memref<64x32xf32, #tpu.memory_space<vmem>>, vector<8x32xf32>
    tpu.vector_store %arg13[%c40_54, %c0_55], %143 {strides = array<i32>} : memref<64x32xf32, #tpu.memory_space<vmem>>, vector<8x32xf32>,
    %c48 = arith.constant 48 : index
    %c0_56 = arith.constant 0 : index
    %145 = vector.load %arg12[%c48, %c0_56] : memref<64x128xf32, #tpu.memory_space<vmem>>, vector<8x128xf32>
    %cst_57 = arith.constant dense<0.000000e+00> : vector<8x128xf32>
    %146 = tpu.matmul %143, %20, %cst_57 {dimension_numbers = #tpu.dot_dimension_numbers<[1], [0], [0], [1], [0, 0, 1, 1], [], []>} : vector<8x32xf32>, vector<32x128xf32>, vector<8x128xf32> -> vector<8x128xf32>
    %147 = arith.addf %145, %146 : vector<8x128xf32>
    %148 = arith.mulf %147, %11 : vector<8x128xf32>
    %149 = math.tanh %148 : vector<8x128xf32>
    %cst_58 = arith.constant 1.000000e+00 : f32
    %150 = vector.broadcast %cst_58 : f32 to vector<8x128xf32>
    %151 = arith.addf %149, %150 : vector<8x128xf32>
    %cst_59 = arith.constant 5.000000e-01 : f32
    %152 = vector.broadcast %cst_59 : f32 to vector<8x128xf32>
    %153 = arith.mulf %152, %151 : vector<8x128xf32>
    %154 = arith.select %8, %149, %153 : vector<8x128xi1>, vector<8x128xf32>
    %155 = vector.extract_strided_slice %154 {offsets = [0, 0], sizes = [8, 32], strides = [1, 1]} : vector<8x128xf32> to vector<8x32xf32>
    %156 = vector.extract_strided_slice %154 {offsets = [0, 32], sizes = [8, 32], strides = [1, 1]} : vector<8x128xf32> to vector<8x32xf32>
    %157 = vector.extract_strided_slice %154 {offsets = [0, 64], sizes = [8, 32], strides = [1, 1]} : vector<8x128xf32> to vector<8x32xf32>
    %158 = vector.extract_strided_slice %154 {offsets = [0, 96], sizes = [8, 32], strides = [1, 1]} : vector<8x128xf32> to vector<8x32xf32>
    %159 = arith.mulf %156, %141 : vector<8x32xf32>
    %160 = arith.mulf %155, %157 : vector<8x32xf32>
    %161 = arith.addf %159, %160 : vector<8x32xf32>
    %162 = math.tanh %161 : vector<8x32xf32>
    %163 = arith.mulf %158, %162 : vector<8x32xf32>
    %c48_60 = arith.constant 48 : index
    %c0_61 = arith.constant 0 : index
    %164 = vector.load %arg13[%c48_60, %c0_61] : memref<64x32xf32, #tpu.memory_space<vmem>>, vector<8x32xf32>
    tpu.vector_store %arg13[%c48_60, %c0_61], %163 {strides = array<i32>} : memref<64x32xf32, #tpu.memory_space<vmem>>, vector<8x32xf32>,
    %c56 = arith.constant 56 : index
    %c0_62 = arith.constant 0 : index
    %165 = vector.load %arg12[%c56, %c0_62] : memref<64x128xf32, #tpu.memory_space<vmem>>, vector<8x128xf32>
    %cst_63 = arith.constant dense<0.000000e+00> : vector<8x128xf32>
    %166 = tpu.matmul %163, %20, %cst_63 {dimension_numbers = #tpu.dot_dimension_numbers<[1], [0], [0], [1], [0, 0, 1, 1], [], []>} : vector<8x32xf32>, vector<32x128xf32>, vector<8x128xf32> -> vector<8x128xf32>
    %167 = arith.addf %165, %166 : vector<8x128xf32>
    %168 = arith.mulf %167, %11 : vector<8x128xf32>
    %169 = math.tanh %168 : vector<8x128xf32>
    %cst_64 = arith.constant 1.000000e+00 : f32
    %170 = vector.broadcast %cst_64 : f32 to vector<8x128xf32>
    %171 = arith.addf %169, %170 : vector<8x128xf32>
    %cst_65 = arith.constant 5.000000e-01 : f32
    %172 = vector.broadcast %cst_65 : f32 to vector<8x128xf32>
    %173 = arith.mulf %172, %171 : vector<8x128xf32>
    %174 = arith.select %8, %169, %173 : vector<8x128xi1>, vector<8x128xf32>
    %175 = vector.extract_strided_slice %174 {offsets = [0, 0], sizes = [8, 32], strides = [1, 1]} : vector<8x128xf32> to vector<8x32xf32>
    %176 = vector.extract_strided_slice %174 {offsets = [0, 32], sizes = [8, 32], strides = [1, 1]} : vector<8x128xf32> to vector<8x32xf32>
    %177 = vector.extract_strided_slice %174 {offsets = [0, 64], sizes = [8, 32], strides = [1, 1]} : vector<8x128xf32> to vector<8x32xf32>
    %178 = vector.extract_strided_slice %174 {offsets = [0, 96], sizes = [8, 32], strides = [1, 1]} : vector<8x128xf32> to vector<8x32xf32>
    %179 = arith.mulf %176, %161 : vector<8x32xf32>
    %180 = arith.mulf %175, %177 : vector<8x32xf32>
    %181 = arith.addf %179, %180 : vector<8x32xf32>
    %182 = math.tanh %181 : vector<8x32xf32>
    %183 = arith.mulf %178, %182 : vector<8x32xf32>
    %c56_66 = arith.constant 56 : index
    %c0_67 = arith.constant 0 : index
    %184 = vector.load %arg13[%c56_66, %c0_67] : memref<64x32xf32, #tpu.memory_space<vmem>>, vector<8x32xf32>
    tpu.vector_store %arg13[%c56_66, %c0_67], %183 {strides = array<i32>} : memref<64x32xf32, #tpu.memory_space<vmem>>, vector<8x32xf32>,
    %c0_68 = arith.constant 0 : index
    %c0_69 = arith.constant 0 : index
    %c0_70 = arith.constant 0 : index
    %185 = vector.load %arg10[%c0_68, %c0_69, %c0_70] : memref<2x8x32xf32, #tpu.memory_space<vmem>>, vector<1x8x32xf32>
    %186 = vector.shape_cast %185 : vector<1x8x32xf32> to vector<8x32xf32>
    %187 = vector.shape_cast %183 : vector<8x32xf32> to vector<1x8x32xf32>
    tpu.vector_store %arg10[%c0_68, %c0_69, %c0_70], %187 {strides = array<i32>} : memref<2x8x32xf32, #tpu.memory_space<vmem>>, vector<1x8x32xf32>,
    %c0_71 = arith.constant 0 : index
    %c0_72 = arith.constant 0 : index
    %c0_73 = arith.constant 0 : index
    %188 = vector.load %arg11[%c0_71, %c0_72, %c0_73] : memref<2x8x32xf32, #tpu.memory_space<vmem>>, vector<1x8x32xf32>
    %189 = vector.shape_cast %188 : vector<1x8x32xf32> to vector<8x32xf32>
    %190 = vector.shape_cast %181 : vector<8x32xf32> to vector<1x8x32xf32>
    tpu.vector_store %arg11[%c0_71, %c0_72, %c0_73], %190 {strides = array<i32>} : memref<2x8x32xf32, #tpu.memory_space<vmem>>, vector<1x8x32xf32>,
    %c0_74 = arith.constant 0 : index
    %c0_75 = arith.constant 0 : index
    %191 = vector.load %arg13[%c0_74, %c0_75] : memref<64x32xf32, #tpu.memory_space<vmem>>, vector<64x32xf32>
    %c0_76 = arith.constant 0 : index
    %c0_77 = arith.constant 0 : index
    %c0_78 = arith.constant 0 : index
    %192 = vector.load %arg4[%c0_76, %c0_77, %c0_78] : memref<1x32x128xf32, #tpu.memory_space<vmem>>, vector<1x32x128xf32>
    %193 = vector.shape_cast %192 : vector<1x32x128xf32> to vector<32x128xf32>
    %cst_79 = arith.constant dense<0.000000e+00> : vector<64x128xf32>
    %194 = tpu.matmul %191, %193, %cst_79 {dimension_numbers = #tpu.dot_dimension_numbers<[1], [0], [0], [1], [0, 0, 1, 1], [], []>} : vector<64x32xf32>, vector<32x128xf32>, vector<64x128xf32> -> vector<64x128xf32>
    %c0_80 = arith.constant 0 : index
    %c0_81 = arith.constant 0 : index
    %c0_82 = arith.constant 0 : index
    %195 = vector.load %arg6[%c0_80, %c0_81, %c0_82] : memref<1x1x128xf32, #tpu.memory_space<vmem>>, vector<1x1x128xf32>
    %196 = vector.shape_cast %195 : vector<1x1x128xf32> to vector<1x128xf32>
    %197 = vector.broadcast %196 : vector<1x128xf32> to vector<64x128xf32>
    %198 = arith.addf %194, %197 : vector<64x128xf32>
    %c0_83 = arith.constant 0 : index
    %c0_84 = arith.constant 0 : index
    %199 = vector.load %arg12[%c0_83, %c0_84] : memref<64x128xf32, #tpu.memory_space<vmem>>, vector<64x128xf32>
    tpu.vector_store %arg12[%c0_83, %c0_84], %198 {strides = array<i32>} : memref<64x128xf32, #tpu.memory_space<vmem>>, vector<64x128xf32>,
    %c1 = arith.constant 1 : index
    %c0_85 = arith.constant 0 : index
    %c0_86 = arith.constant 0 : index
    %200 = vector.load %arg5[%c1, %c0_85, %c0_86] : memref<2x32x128xf32, #tpu.memory_space<vmem>>, vector<1x32x128xf32>
    %201 = vector.shape_cast %200 : vector<1x32x128xf32> to vector<32x128xf32>
    %c1_87 = arith.constant 1 : index
    %c0_88 = arith.constant 0 : index
    %c0_89 = arith.constant 0 : index
    %202 = vector.load %arg10[%c1_87, %c0_88, %c0_89] : memref<2x8x32xf32, #tpu.memory_space<vmem>>, vector<1x8x32xf32>
    %203 = vector.shape_cast %202 : vector<1x8x32xf32> to vector<8x32xf32>
    %c1_90 = arith.constant 1 : index
    %c0_91 = arith.constant 0 : index
    %c0_92 = arith.constant 0 : index
    %204 = vector.load %arg11[%c1_90, %c0_91, %c0_92] : memref<2x8x32xf32, #tpu.memory_space<vmem>>, vector<1x8x32xf32>
    %205 = vector.shape_cast %204 : vector<1x8x32xf32> to vector<8x32xf32>
    %c0_93 = arith.constant 0 : index
    %c0_94 = arith.constant 0 : index
    %206 = vector.load %arg12[%c0_93, %c0_94] : memref<64x128xf32, #tpu.memory_space<vmem>>, vector<8x128xf32>
    %cst_95 = arith.constant dense<0.000000e+00> : vector<8x128xf32>
    %207 = tpu.matmul %203, %201, %cst_95 {dimension_numbers = #tpu.dot_dimension_numbers<[1], [0], [0], [1], [0, 0, 1, 1], [], []>} : vector<8x32xf32>, vector<32x128xf32>, vector<8x128xf32> -> vector<8x128xf32>
    %208 = arith.addf %206, %207 : vector<8x128xf32>
    %209 = arith.mulf %208, %11 : vector<8x128xf32>
    %210 = math.tanh %209 : vector<8x128xf32>
    %cst_96 = arith.constant 1.000000e+00 : f32
    %211 = vector.broadcast %cst_96 : f32 to vector<8x128xf32>
    %212 = arith.addf %210, %211 : vector<8x128xf32>
    %cst_97 = arith.constant 5.000000e-01 : f32
    %213 = vector.broadcast %cst_97 : f32 to vector<8x128xf32>
    %214 = arith.mulf %213, %212 : vector<8x128xf32>
    %215 = arith.select %8, %210, %214 : vector<8x128xi1>, vector<8x128xf32>
    %216 = vector.extract_strided_slice %215 {offsets = [0, 0], sizes = [8, 32], strides = [1, 1]} : vector<8x128xf32> to vector<8x32xf32>
    %217 = vector.extract_strided_slice %215 {offsets = [0, 32], sizes = [8, 32], strides = [1, 1]} : vector<8x128xf32> to vector<8x32xf32>
    %218 = vector.extract_strided_slice %215 {offsets = [0, 64], sizes = [8, 32], strides = [1, 1]} : vector<8x128xf32> to vector<8x32xf32>
    %219 = vector.extract_strided_slice %215 {offsets = [0, 96], sizes = [8, 32], strides = [1, 1]} : vector<8x128xf32> to vector<8x32xf32>
    %220 = arith.mulf %217, %205 : vector<8x32xf32>
    %221 = arith.mulf %216, %218 : vector<8x32xf32>
    %222 = arith.addf %220, %221 : vector<8x32xf32>
    %223 = math.tanh %222 : vector<8x32xf32>
    %224 = arith.mulf %219, %223 : vector<8x32xf32>
    %c8_98 = arith.constant 8 : index
    %c0_99 = arith.constant 0 : index
    %225 = vector.load %arg12[%c8_98, %c0_99] : memref<64x128xf32, #tpu.memory_space<vmem>>, vector<8x128xf32>
    %cst_100 = arith.constant dense<0.000000e+00> : vector<8x128xf32>
    %226 = tpu.matmul %224, %201, %cst_100 {dimension_numbers = #tpu.dot_dimension_numbers<[1], [0], [0], [1], [0, 0, 1, 1], [], []>} : vector<8x32xf32>, vector<32x128xf32>, vector<8x128xf32> -> vector<8x128xf32>
    %227 = arith.addf %225, %226 : vector<8x128xf32>
    %228 = arith.mulf %227, %11 : vector<8x128xf32>
    %229 = math.tanh %228 : vector<8x128xf32>
    %cst_101 = arith.constant 1.000000e+00 : f32
    %230 = vector.broadcast %cst_101 : f32 to vector<8x128xf32>
    %231 = arith.addf %229, %230 : vector<8x128xf32>
    %cst_102 = arith.constant 5.000000e-01 : f32
    %232 = vector.broadcast %cst_102 : f32 to vector<8x128xf32>
    %233 = arith.mulf %232, %231 : vector<8x128xf32>
    %234 = arith.select %8, %229, %233 : vector<8x128xi1>, vector<8x128xf32>
    %235 = vector.extract_strided_slice %234 {offsets = [0, 0], sizes = [8, 32], strides = [1, 1]} : vector<8x128xf32> to vector<8x32xf32>
    %236 = vector.extract_strided_slice %234 {offsets = [0, 32], sizes = [8, 32], strides = [1, 1]} : vector<8x128xf32> to vector<8x32xf32>
    %237 = vector.extract_strided_slice %234 {offsets = [0, 64], sizes = [8, 32], strides = [1, 1]} : vector<8x128xf32> to vector<8x32xf32>
    %238 = vector.extract_strided_slice %234 {offsets = [0, 96], sizes = [8, 32], strides = [1, 1]} : vector<8x128xf32> to vector<8x32xf32>
    %239 = arith.mulf %236, %222 : vector<8x32xf32>
    %240 = arith.mulf %235, %237 : vector<8x32xf32>
    %241 = arith.addf %239, %240 : vector<8x32xf32>
    %242 = math.tanh %241 : vector<8x32xf32>
    %243 = arith.mulf %238, %242 : vector<8x32xf32>
    %c16_103 = arith.constant 16 : index
    %c0_104 = arith.constant 0 : index
    %244 = vector.load %arg12[%c16_103, %c0_104] : memref<64x128xf32, #tpu.memory_space<vmem>>, vector<8x128xf32>
    %cst_105 = arith.constant dense<0.000000e+00> : vector<8x128xf32>
    %245 = tpu.matmul %243, %201, %cst_105 {dimension_numbers = #tpu.dot_dimension_numbers<[1], [0], [0], [1], [0, 0, 1, 1], [], []>} : vector<8x32xf32>, vector<32x128xf32>, vector<8x128xf32> -> vector<8x128xf32>
    %246 = arith.addf %244, %245 : vector<8x128xf32>
    %247 = arith.mulf %246, %11 : vector<8x128xf32>
    %248 = math.tanh %247 : vector<8x128xf32>
    %cst_106 = arith.constant 1.000000e+00 : f32
    %249 = vector.broadcast %cst_106 : f32 to vector<8x128xf32>
    %250 = arith.addf %248, %249 : vector<8x128xf32>
    %cst_107 = arith.constant 5.000000e-01 : f32
    %251 = vector.broadcast %cst_107 : f32 to vector<8x128xf32>
    %252 = arith.mulf %251, %250 : vector<8x128xf32>
    %253 = arith.select %8, %248, %252 : vector<8x128xi1>, vector<8x128xf32>
    %254 = vector.extract_strided_slice %253 {offsets = [0, 0], sizes = [8, 32], strides = [1, 1]} : vector<8x128xf32> to vector<8x32xf32>
    %255 = vector.extract_strided_slice %253 {offsets = [0, 32], sizes = [8, 32], strides = [1, 1]} : vector<8x128xf32> to vector<8x32xf32>
    %256 = vector.extract_strided_slice %253 {offsets = [0, 64], sizes = [8, 32], strides = [1, 1]} : vector<8x128xf32> to vector<8x32xf32>
    %257 = vector.extract_strided_slice %253 {offsets = [0, 96], sizes = [8, 32], strides = [1, 1]} : vector<8x128xf32> to vector<8x32xf32>
    %258 = arith.mulf %255, %241 : vector<8x32xf32>
    %259 = arith.mulf %254, %256 : vector<8x32xf32>
    %260 = arith.addf %258, %259 : vector<8x32xf32>
    %261 = math.tanh %260 : vector<8x32xf32>
    %262 = arith.mulf %257, %261 : vector<8x32xf32>
    %c24_108 = arith.constant 24 : index
    %c0_109 = arith.constant 0 : index
    %263 = vector.load %arg12[%c24_108, %c0_109] : memref<64x128xf32, #tpu.memory_space<vmem>>, vector<8x128xf32>
    %cst_110 = arith.constant dense<0.000000e+00> : vector<8x128xf32>
    %264 = tpu.matmul %262, %201, %cst_110 {dimension_numbers = #tpu.dot_dimension_numbers<[1], [0], [0], [1], [0, 0, 1, 1], [], []>} : vector<8x32xf32>, vector<32x128xf32>, vector<8x128xf32> -> vector<8x128xf32>
    %265 = arith.addf %263, %264 : vector<8x128xf32>
    %266 = arith.mulf %265, %11 : vector<8x128xf32>
    %267 = math.tanh %266 : vector<8x128xf32>
    %cst_111 = arith.constant 1.000000e+00 : f32
    %268 = vector.broadcast %cst_111 : f32 to vector<8x128xf32>
    %269 = arith.addf %267, %268 : vector<8x128xf32>
    %cst_112 = arith.constant 5.000000e-01 : f32
    %270 = vector.broadcast %cst_112 : f32 to vector<8x128xf32>
    %271 = arith.mulf %270, %269 : vector<8x128xf32>
    %272 = arith.select %8, %267, %271 : vector<8x128xi1>, vector<8x128xf32>
    %273 = vector.extract_strided_slice %272 {offsets = [0, 0], sizes = [8, 32], strides = [1, 1]} : vector<8x128xf32> to vector<8x32xf32>
    %274 = vector.extract_strided_slice %272 {offsets = [0, 32], sizes = [8, 32], strides = [1, 1]} : vector<8x128xf32> to vector<8x32xf32>
    %275 = vector.extract_strided_slice %272 {offsets = [0, 64], sizes = [8, 32], strides = [1, 1]} : vector<8x128xf32> to vector<8x32xf32>
    %276 = vector.extract_strided_slice %272 {offsets = [0, 96], sizes = [8, 32], strides = [1, 1]} : vector<8x128xf32> to vector<8x32xf32>
    %277 = arith.mulf %274, %260 : vector<8x32xf32>
    %278 = arith.mulf %273, %275 : vector<8x32xf32>
    %279 = arith.addf %277, %278 : vector<8x32xf32>
    %280 = math.tanh %279 : vector<8x32xf32>
    %281 = arith.mulf %276, %280 : vector<8x32xf32>
    %c32_113 = arith.constant 32 : index
    %c0_114 = arith.constant 0 : index
    %282 = vector.load %arg12[%c32_113, %c0_114] : memref<64x128xf32, #tpu.memory_space<vmem>>, vector<8x128xf32>
    %cst_115 = arith.constant dense<0.000000e+00> : vector<8x128xf32>
    %283 = tpu.matmul %281, %201, %cst_115 {dimension_numbers = #tpu.dot_dimension_numbers<[1], [0], [0], [1], [0, 0, 1, 1], [], []>} : vector<8x32xf32>, vector<32x128xf32>, vector<8x128xf32> -> vector<8x128xf32>
    %284 = arith.addf %282, %283 : vector<8x128xf32>
    %285 = arith.mulf %284, %11 : vector<8x128xf32>
    %286 = math.tanh %285 : vector<8x128xf32>
    %cst_116 = arith.constant 1.000000e+00 : f32
    %287 = vector.broadcast %cst_116 : f32 to vector<8x128xf32>
    %288 = arith.addf %286, %287 : vector<8x128xf32>
    %cst_117 = arith.constant 5.000000e-01 : f32
    %289 = vector.broadcast %cst_117 : f32 to vector<8x128xf32>
    %290 = arith.mulf %289, %288 : vector<8x128xf32>
    %291 = arith.select %8, %286, %290 : vector<8x128xi1>, vector<8x128xf32>
    %292 = vector.extract_strided_slice %291 {offsets = [0, 0], sizes = [8, 32], strides = [1, 1]} : vector<8x128xf32> to vector<8x32xf32>
    %293 = vector.extract_strided_slice %291 {offsets = [0, 32], sizes = [8, 32], strides = [1, 1]} : vector<8x128xf32> to vector<8x32xf32>
    %294 = vector.extract_strided_slice %291 {offsets = [0, 64], sizes = [8, 32], strides = [1, 1]} : vector<8x128xf32> to vector<8x32xf32>
    %295 = vector.extract_strided_slice %291 {offsets = [0, 96], sizes = [8, 32], strides = [1, 1]} : vector<8x128xf32> to vector<8x32xf32>
    %296 = arith.mulf %293, %279 : vector<8x32xf32>
    %297 = arith.mulf %292, %294 : vector<8x32xf32>
    %298 = arith.addf %296, %297 : vector<8x32xf32>
    %299 = math.tanh %298 : vector<8x32xf32>
    %300 = arith.mulf %295, %299 : vector<8x32xf32>
    %c40_118 = arith.constant 40 : index
    %c0_119 = arith.constant 0 : index
    %301 = vector.load %arg12[%c40_118, %c0_119] : memref<64x128xf32, #tpu.memory_space<vmem>>, vector<8x128xf32>
    %cst_120 = arith.constant dense<0.000000e+00> : vector<8x128xf32>
    %302 = tpu.matmul %300, %201, %cst_120 {dimension_numbers = #tpu.dot_dimension_numbers<[1], [0], [0], [1], [0, 0, 1, 1], [], []>} : vector<8x32xf32>, vector<32x128xf32>, vector<8x128xf32> -> vector<8x128xf32>
    %303 = arith.addf %301, %302 : vector<8x128xf32>
    %304 = arith.mulf %303, %11 : vector<8x128xf32>
    %305 = math.tanh %304 : vector<8x128xf32>
    %cst_121 = arith.constant 1.000000e+00 : f32
    %306 = vector.broadcast %cst_121 : f32 to vector<8x128xf32>
    %307 = arith.addf %305, %306 : vector<8x128xf32>
    %cst_122 = arith.constant 5.000000e-01 : f32
    %308 = vector.broadcast %cst_122 : f32 to vector<8x128xf32>
    %309 = arith.mulf %308, %307 : vector<8x128xf32>
    %310 = arith.select %8, %305, %309 : vector<8x128xi1>, vector<8x128xf32>
    %311 = vector.extract_strided_slice %310 {offsets = [0, 0], sizes = [8, 32], strides = [1, 1]} : vector<8x128xf32> to vector<8x32xf32>
    %312 = vector.extract_strided_slice %310 {offsets = [0, 32], sizes = [8, 32], strides = [1, 1]} : vector<8x128xf32> to vector<8x32xf32>
    %313 = vector.extract_strided_slice %310 {offsets = [0, 64], sizes = [8, 32], strides = [1, 1]} : vector<8x128xf32> to vector<8x32xf32>
    %314 = vector.extract_strided_slice %310 {offsets = [0, 96], sizes = [8, 32], strides = [1, 1]} : vector<8x128xf32> to vector<8x32xf32>
    %315 = arith.mulf %312, %298 : vector<8x32xf32>
    %316 = arith.mulf %311, %313 : vector<8x32xf32>
    %317 = arith.addf %315, %316 : vector<8x32xf32>
    %318 = math.tanh %317 : vector<8x32xf32>
    %319 = arith.mulf %314, %318 : vector<8x32xf32>
    %c48_123 = arith.constant 48 : index
    %c0_124 = arith.constant 0 : index
    %320 = vector.load %arg12[%c48_123, %c0_124] : memref<64x128xf32, #tpu.memory_space<vmem>>, vector<8x128xf32>
    %cst_125 = arith.constant dense<0.000000e+00> : vector<8x128xf32>
    %321 = tpu.matmul %319, %201, %cst_125 {dimension_numbers = #tpu.dot_dimension_numbers<[1], [0], [0], [1], [0, 0, 1, 1], [], []>} : vector<8x32xf32>, vector<32x128xf32>, vector<8x128xf32> -> vector<8x128xf32>
    %322 = arith.addf %320, %321 : vector<8x128xf32>
    %323 = arith.mulf %322, %11 : vector<8x128xf32>
    %324 = math.tanh %323 : vector<8x128xf32>
    %cst_126 = arith.constant 1.000000e+00 : f32
    %325 = vector.broadcast %cst_126 : f32 to vector<8x128xf32>
    %326 = arith.addf %324, %325 : vector<8x128xf32>
    %cst_127 = arith.constant 5.000000e-01 : f32
    %327 = vector.broadcast %cst_127 : f32 to vector<8x128xf32>
    %328 = arith.mulf %327, %326 : vector<8x128xf32>
    %329 = arith.select %8, %324, %328 : vector<8x128xi1>, vector<8x128xf32>
    %330 = vector.extract_strided_slice %329 {offsets = [0, 0], sizes = [8, 32], strides = [1, 1]} : vector<8x128xf32> to vector<8x32xf32>
    %331 = vector.extract_strided_slice %329 {offsets = [0, 32], sizes = [8, 32], strides = [1, 1]} : vector<8x128xf32> to vector<8x32xf32>
    %332 = vector.extract_strided_slice %329 {offsets = [0, 64], sizes = [8, 32], strides = [1, 1]} : vector<8x128xf32> to vector<8x32xf32>
    %333 = vector.extract_strided_slice %329 {offsets = [0, 96], sizes = [8, 32], strides = [1, 1]} : vector<8x128xf32> to vector<8x32xf32>
    %334 = arith.mulf %331, %317 : vector<8x32xf32>
    %335 = arith.mulf %330, %332 : vector<8x32xf32>
    %336 = arith.addf %334, %335 : vector<8x32xf32>
    %337 = math.tanh %336 : vector<8x32xf32>
    %338 = arith.mulf %333, %337 : vector<8x32xf32>
    %c56_128 = arith.constant 56 : index
    %c0_129 = arith.constant 0 : index
    %339 = vector.load %arg12[%c56_128, %c0_129] : memref<64x128xf32, #tpu.memory_space<vmem>>, vector<8x128xf32>
    %cst_130 = arith.constant dense<0.000000e+00> : vector<8x128xf32>
    %340 = tpu.matmul %338, %201, %cst_130 {dimension_numbers = #tpu.dot_dimension_numbers<[1], [0], [0], [1], [0, 0, 1, 1], [], []>} : vector<8x32xf32>, vector<32x128xf32>, vector<8x128xf32> -> vector<8x128xf32>
    %341 = arith.addf %339, %340 : vector<8x128xf32>
    %342 = arith.mulf %341, %11 : vector<8x128xf32>
    %343 = math.tanh %342 : vector<8x128xf32>
    %cst_131 = arith.constant 1.000000e+00 : f32
    %344 = vector.broadcast %cst_131 : f32 to vector<8x128xf32>
    %345 = arith.addf %343, %344 : vector<8x128xf32>
    %cst_132 = arith.constant 5.000000e-01 : f32
    %346 = vector.broadcast %cst_132 : f32 to vector<8x128xf32>
    %347 = arith.mulf %346, %345 : vector<8x128xf32>
    %348 = arith.select %8, %343, %347 : vector<8x128xi1>, vector<8x128xf32>
    %349 = vector.extract_strided_slice %348 {offsets = [0, 0], sizes = [8, 32], strides = [1, 1]} : vector<8x128xf32> to vector<8x32xf32>
    %350 = vector.extract_strided_slice %348 {offsets = [0, 32], sizes = [8, 32], strides = [1, 1]} : vector<8x128xf32> to vector<8x32xf32>
    %351 = vector.extract_strided_slice %348 {offsets = [0, 64], sizes = [8, 32], strides = [1, 1]} : vector<8x128xf32> to vector<8x32xf32>
    %352 = vector.extract_strided_slice %348 {offsets = [0, 96], sizes = [8, 32], strides = [1, 1]} : vector<8x128xf32> to vector<8x32xf32>
    %353 = arith.mulf %350, %336 : vector<8x32xf32>
    %354 = arith.mulf %349, %351 : vector<8x32xf32>
    %355 = arith.addf %353, %354 : vector<8x32xf32>
    %356 = math.tanh %355 : vector<8x32xf32>
    %357 = arith.mulf %352, %356 : vector<8x32xf32>
    %c1_133 = arith.constant 1 : index
    %c0_134 = arith.constant 0 : index
    %c0_135 = arith.constant 0 : index
    %358 = vector.load %arg10[%c1_133, %c0_134, %c0_135] : memref<2x8x32xf32, #tpu.memory_space<vmem>>, vector<1x8x32xf32>
    %359 = vector.shape_cast %358 : vector<1x8x32xf32> to vector<8x32xf32>
    %360 = vector.shape_cast %357 : vector<8x32xf32> to vector<1x8x32xf32>
    tpu.vector_store %arg10[%c1_133, %c0_134, %c0_135], %360 {strides = array<i32>} : memref<2x8x32xf32, #tpu.memory_space<vmem>>, vector<1x8x32xf32>,
    %c1_136 = arith.constant 1 : index
    %c0_137 = arith.constant 0 : index
    %c0_138 = arith.constant 0 : index
    %361 = vector.load %arg11[%c1_136, %c0_137, %c0_138] : memref<2x8x32xf32, #tpu.memory_space<vmem>>, vector<1x8x32xf32>
    %362 = vector.shape_cast %361 : vector<1x8x32xf32> to vector<8x32xf32>
    %363 = vector.shape_cast %355 : vector<8x32xf32> to vector<1x8x32xf32>
    tpu.vector_store %arg11[%c1_136, %c0_137, %c0_138], %363 {strides = array<i32>} : memref<2x8x32xf32, #tpu.memory_space<vmem>>, vector<1x8x32xf32>,
    %c0_i32_139 = arith.constant 0 : i32
    %364 = arith.cmpi eq, %arg0, %c0_i32_139 : i32
    %365 = arith.extui %364 : i1 to i32
    %c0_i32_140 = arith.constant 0 : i32
    %366 = arith.cmpi ne, %365, %c0_i32_140 : i32
    scf.if %366 {
      %c0_141 = arith.constant 0 : index
      %c0_142 = arith.constant 0 : index
      %367 = vector.load %arg7[%c0_141, %c0_142] : memref<1x32xf32, #tpu.memory_space<vmem>>, vector<1x32xf32>
      %368 = vector.broadcast %367 : vector<1x32xf32> to vector<8x32xf32>
      %369 = arith.mulf %357, %368 : vector<8x32xf32>
      %cst_143 = arith.constant dense<0.000000e+00> : vector<8xf32>
      %370 = vector.multi_reduction <add>, %369, %cst_143 [1] : vector<8x32xf32> to vector<8xf32>
      %371 = vector.shape_cast %370 : vector<8xf32> to vector<8x1xf32>
      %c0_144 = arith.constant 0 : index
      %c0_145 = arith.constant 0 : index
      %372 = vector.load %arg8[%c0_144, %c0_145] : memref<1x1xf32, #tpu.memory_space<vmem>>, vector<1x1xf32>
      %373 = vector.broadcast %372 : vector<1x1xf32> to vector<8x1xf32>
      %374 = arith.addf %371, %373 : vector<8x1xf32>
      %cst_146 = arith.constant 0.000000e+00 : f32
      %375 = vector.broadcast %cst_146 : f32 to vector<8x1xf32>
      %376 = arith.maximumf %374, %375 : vector<8x1xf32>
      %c0_147 = arith.constant 0 : index
      %c0_148 = arith.constant 0 : index
      %377 = vector.load %arg9[%c0_147, %c0_148] : memref<8x1xf32, #tpu.memory_space<vmem>>, vector<8x1xf32>
      tpu.vector_store %arg9[%c0_147, %c0_148], %376 {strides = array<i32>} : memref<8x1xf32, #tpu.memory_space<vmem>>, vector<8x1xf32>,
    } else {
    }
    return
  }
  func.func @transform_0(%arg0: i32) -> (i32, i32) {
    %c0_i32 = arith.constant 0 : i32
    %c0_i32_0 = arith.constant 0 : i32
    return %arg0, %c0_i32 : i32, i32
  }
  func.func @transform_1(%arg0: i32) -> (i32, i32) {
    %c0_i32 = arith.constant 0 : i32
    %c0_i32_0 = arith.constant 0 : i32
    %c0_i32_1 = arith.constant 0 : i32
    return %c0_i32, %c0_i32_0 : i32, i32
  }
  func.func @transform_2(%arg0: i32) -> (i32, i32) {
    %c0_i32 = arith.constant 0 : i32
    %c0_i32_0 = arith.constant 0 : i32
    %c0_i32_1 = arith.constant 0 : i32
    return %c0_i32, %c0_i32_0 : i32, i32
  }
  func.func @transform_3(%arg0: i32) -> (i32, i32, i32) {
    %c0_i32 = arith.constant 0 : i32
    %c0_i32_0 = arith.constant 0 : i32
    %c0_i32_1 = arith.constant 0 : i32
    %c0_i32_2 = arith.constant 0 : i32
    return %c0_i32, %c0_i32_0, %c0_i32_1 : i32, i32, i32
  }
  func.func @transform_4(%arg0: i32) -> (i32, i32, i32) {
    %c0_i32 = arith.constant 0 : i32
    %c0_i32_0 = arith.constant 0 : i32
    %c0_i32_1 = arith.constant 0 : i32
    %c0_i32_2 = arith.constant 0 : i32
    return %c0_i32, %c0_i32_0, %c0_i32_1 : i32, i32, i32
  }
  func.func @transform_5(%arg0: i32) -> (i32, i32, i32) {
    %c0_i32 = arith.constant 0 : i32
    %c0_i32_0 = arith.constant 0 : i32
    %c0_i32_1 = arith.constant 0 : i32
    %c0_i32_2 = arith.constant 0 : i32
    return %c0_i32, %c0_i32_0, %c0_i32_1 : i32, i32, i32
  }
  func.func @transform_6(%arg0: i32) -> (i32, i32) {
    %c0_i32 = arith.constant 0 : i32
    %c0_i32_0 = arith.constant 0 : i32
    %c0_i32_1 = arith.constant 0 : i32
    return %c0_i32, %c0_i32_0 : i32, i32
  }
  func.func @transform_7(%arg0: i32) -> (i32, i32) {
    %c0_i32 = arith.constant 0 : i32
    %c0_i32_0 = arith.constant 0 : i32
    %c0_i32_1 = arith.constant 0 : i32
    return %c0_i32, %c0_i32_0 : i32, i32
  }
  func.func @transform_8(%arg0: i32) -> (i32, i32) {
    %c0_i32 = arith.constant 0 : i32
    %c0_i32_0 = arith.constant 0 : i32
    %c0_i32_1 = arith.constant 0 : i32
    return %c0_i32, %c0_i32_0 : i32, i32
  }
}

</mosaic_0001>

<llo_original>
// kernel: tpu_custom_call.1
$region0: #{tpu_custom_call.1}
  #allocation0 [shape = 'u32[]', space=smem, size = 0x4, offset = 0x4, fixed_abs, tag = 'smem constant byte address 0x4 - core index']
  #allocation1 [shape = 'u32[144,128]{1,0:T(1,128)}', space=vmem, size = 0x12000, scoped, tag = 'internal scratch']
  #allocation2 [shape = 'f32[2,8,32]{2,1,0:T(8,128)}', space=vmem, size = 0x2000, scoped, tag = 'scratch operand']
  #allocation3 [shape = 'f32[2,8,32]{2,1,0:T(8,128)}', space=vmem, size = 0x2000, scoped, tag = 'scratch operand']
  #allocation4 [shape = 'f32[64,128]{1,0:T(8,128)}', space=vmem, size = 0x8000, scoped, tag = 'scratch operand']
  #allocation5 [shape = 'f32[64,32]{1,0:T(8,128)}', space=vmem, size = 0x8000, scoped, tag = 'scratch operand']
  #allocation6 [shape = 'f32[1,1]{1,0:T(1,128)S(1)}', space=vmem, size = 0x200, scoped, tag = 'scoped memory for tpu_custom_call.1']
  %s0 = inlined_call_operand.vmem [shape: f32[64,4], index: 0, kind: input, shape index: {}]
  %s1 = inlined_call_operand.vmem [shape: f32[4,128], index: 1, kind: input, shape index: {}]
  %s2 = inlined_call_operand.vmem [shape: f32[1,128], index: 2, kind: input, shape index: {}]
  %s3 = inlined_call_operand.hbm [shape: f32[1,32,128], index: 3, kind: input, shape index: {}]
  %s4 = inlined_call_operand.vmem [shape: f32[2,32,128], index: 4, kind: input, shape index: {}]
  %s5 = inlined_call_operand.vmem [shape: f32[1,1,128], index: 5, kind: input, shape index: {}]
  %s6 = inlined_call_operand.vmem [shape: f32[1,32], index: 6, kind: input, shape index: {}]
  %s7 = inlined_call_operand.<no memory space> [shape: f32[1,1], index: 7, kind: input, shape index: {}]
  %s8 = inlined_call_operand.vmem [shape: f32[8,1], index: 8, kind: output, shape index: {}]
  %s9 = sld [smem:[#allocation0]]
  $region54: #{tpu_custom_call.1} parent=0
    _
  %s11 = ssub.s32 1, %s9
  %s12 = scalar_select 0, %s11, %s9
  %v13 = vstv %s7
  %14 = vst [vmem:[#allocation6] sm:$0x1] %v13
  $region1: #{tpu_custom_call.1} parent=0
    #allocation7 [shape = 'u8[16384]{0}', space=vmem, size = 0x4000, scoped, tag = 'input window, operand 3, single buffered']
    #allocation8 [shape = 's32[1]{0}', space=sflag, size = 0x4, scoped, tag = 'scoped memory for tpu_custom_call.1']
    %15 = vsyncpa [#allocation8], 0
    // Predicated region
    $region2: #{tpu_custom_call.1} parent=1 // pred_check
      _
    $region3: #{tpu_custom_call.1} parent=1 // pred_check_branch
      %17 = sbr.rel (0) target = $region5
    $region4: #{tpu_custom_call.1} parent=1 // pred_region
      _
    $region5: #{tpu_custom_call.1} parent=1 // pred_fallthru
      _
    // Predicated region
    $region6: #{tpu_custom_call.1} parent=1 // pred_check
      _
    $region7: #{tpu_custom_call.1} parent=1 // pred_check_branch
      %19 = sbr.rel (0) target = $region9
    $region8: #{tpu_custom_call.1} parent=1 // pred_region
      _
    $region9: #{tpu_custom_call.1} parent=1 // pred_fallthru
      _
    // Predicated region
    $region10: #{tpu_custom_call.1} parent=1 // pred_check
      _
    $region11: #{tpu_custom_call.1} parent=1 // pred_check_branch
      %21 = sbr.rel (0) target = $region13
    $region12: #{tpu_custom_call.1} parent=1 // pred_region
      _
    $region13: #{tpu_custom_call.1} parent=1 // pred_fallthru
      _
    // Predicated region
    $region14: #{tpu_custom_call.1} parent=1 // pred_check
      _
    $region15: #{tpu_custom_call.1} parent=1 // pred_check_branch
      %23 = sbr.rel (0) target = $region17
    $region16: #{tpu_custom_call.1} parent=1 // pred_region
      %s25 = ssub.s32 512, 512
      %26 = vsyncadd [#allocation8], %s25
      %s27 = sshll.u32 [#allocation7], 4
      %s28 = int_to_ptr.vmem [resolvable:$true] %s27
      %33 = dma.hbm_to_vmem [thread:$0]  %s3, 512, %s28, [#allocation8], 128, 128, 8
    $region17: #{tpu_custom_call.1} parent=1 // pred_fallthru
      _
    // Predicated region
    $region18: #{tpu_custom_call.1} parent=1 // pred_check
      _
    $region19: #{tpu_custom_call.1} parent=1 // pred_check_branch
      %35 = sbr.rel (0) target = $region21
    $region20: #{tpu_custom_call.1} parent=1 // pred_region
      _
    $region21: #{tpu_custom_call.1} parent=1 // pred_fallthru
      _
    // Predicated region
    $region22: #{tpu_custom_call.1} parent=1 // pred_check
      _
    $region23: #{tpu_custom_call.1} parent=1 // pred_check_branch
      %37 = sbr.rel (0) target = $region25
    $region24: #{tpu_custom_call.1} parent=1 // pred_region
      _
    $region25: #{tpu_custom_call.1} parent=1 // pred_fallthru
      _
    // Predicated region
    $region26: #{tpu_custom_call.1} parent=1 // pred_check
      _
    $region27: #{tpu_custom_call.1} parent=1 // pred_check_branch
      %39 = sbr.rel (0) target = $region29
    $region28: #{tpu_custom_call.1} parent=1 // pred_region
      _
    $region29: #{tpu_custom_call.1} parent=1 // pred_fallthru
      _
    // Predicated region
    $region30: #{tpu_custom_call.1} parent=1 // pred_check
      _
    $region31: #{tpu_custom_call.1} parent=1 // pred_check_branch
      %41 = sbr.rel (0) target = $region33
    $region32: #{tpu_custom_call.1} parent=1 // pred_region
      _
    $region33: #{tpu_custom_call.1} parent=1 // pred_fallthru
      _
    // Predicated region
    $region34: #{tpu_custom_call.1} parent=1 // pred_check
      _
    $region35: #{tpu_custom_call.1} parent=1 // pred_check_branch
      %43 = sbr.rel (0) target = $region37
    $region36: #{tpu_custom_call.1} parent=1 // pred_region
      %44 = dma.done [#allocation8], 512
    $region37: #{tpu_custom_call.1} parent=1 // pred_fallthru
      _
    %p45 = scmp.eq.s32.totalorder 0, 0
    // Predicated region
    $region38: #{tpu_custom_call.1} parent=1 // pred_check
      %p46 = pneg %p45
    $region39: #{tpu_custom_call.1} parent=1 // pred_check_branch
      %48 = sbr.rel (%p46) target = $region41
    $region40: #{tpu_custom_call.1} parent=1 // pred_region
      %vm49 = vcmask 261120
      %50 = vst.msk [vmem:[#allocation2] sm:$0xff] %vm49, 0.0
      %51 = vst.msk [vmem:[#allocation2 + $0x8] sm:$0xff] %vm49, 0.0
      %52 = vst.msk [vmem:[#allocation3] sm:$0xff] %vm49, 0.0
      %53 = vst.msk [vmem:[#allocation3 + $0x8] sm:$0xff] %vm49, 0.0
    $region41: #{tpu_custom_call.1} parent=1 // pred_fallthru
      _
    %v54 = vlaneseq
    %v55 = vand.u32 %v54, 127
    %vm56 = vcmp.ge.s32.totalorder %v55, 64
    %vm57 = vcmp.lt.s32.totalorder %v55, 96
    %vm58 = vmand %vm56, %vm57
    %v59 = vsel %vm58, 1.0, 0.5
    %v60 = vld [vmem:[%s0] sm:$0xff]
    %v61 = vld [vmem:[%s0 + $0x8] sm:$0xff]
    %v62 = vld [vmem:[%s0 + $0x10] sm:$0xff]
    %v63 = vld [vmem:[%s0 + $0x18] sm:$0xff]
    %v64 = vld [vmem:[%s0 + $0x20] sm:$0xff]
    %v65 = vld [vmem:[%s0 + $0x28] sm:$0xff]
    %v66 = vld [vmem:[%s0 + $0x30] sm:$0xff]
    %v67 = vld [vmem:[%s0 + $0x38] sm:$0xff]
    %v68 = vld [vmem:[%s1] sm:$0xf]
    %v69 = vld [vmem:[%s2] sm:$0x1]
    %v71 = vlaneseq
    %v72 = vshrl.u32 %v71, 7
    %v73 = vsub.s32 0, %v72
    %v74 = vrot.slane %v69, %v73
    %vm76 = vcmask 31744
    %v78 = vsel %vm76, %v60, 0
    %v81 = vsel %vm76, %v61, 0
    %v84 = vsel %vm76, %v62, 0
    %v87 = vsel %vm76, %v63, 0
    %v90 = vsel %vm76, %v64, 0
    %v93 = vsel %vm76, %v65, 0
    %v96 = vsel %vm76, %v66, 0
    %v99 = vsel %vm76, %v67, 0
    %vm101 = vcmask 1043456
    %v103 = vsel %vm101, %v68, 0
    %105 = vmatprep.subr.mxu0 0.0
    %106 = vmatpush1.msra.mxu0 %v103
    %107 = vmatprep.subr.mxu0 0.0
    %108 = vmatpush1.msra.mxu0 0.0
    %109 = vmatprep.subr.mxu0 0.0
    %110 = vmatpush1.msra.mxu0 0.0
    %111 = vmatprep.subr.mxu0 0.0
    %112 = vmatpush1.msra.mxu0 0.0
    %113 = vmatprep.subr.mxu0 0.0
    %114 = vmatpush1.msra.mxu0 0.0
    %115 = vmatprep.subr.mxu0 0.0
    %116 = vmatpush1.msra.mxu0 0.0
    %117 = vmatprep.subr.mxu0 0.0
    %118 = vmatpush1.msra.mxu0 0.0
    %119 = vmatprep.subr.mxu0 0.0
    %120 = vmatpush1.msra.mxu0 0.0
    %121 = vmatprep.subr.mxu0 0.0
    %122 = vmatpush1.msra.mxu0 0.0
    %123 = vmatprep.subr.mxu0 0.0
    %124 = vmatpush1.msra.mxu0 0.0
    %125 = vmatprep.subr.mxu0 0.0
    %126 = vmatpush1.msra.mxu0 0.0
    %127 = vmatprep.subr.mxu0 0.0
    %128 = vmatpush1.msra.mxu0 0.0
    %129 = vmatprep.subr.mxu0 0.0
    %130 = vmatpush1.msra.mxu0 0.0
    %131 = vmatprep.subr.mxu0 0.0
    %132 = vmatpush1.msra.mxu0 0.0
    %133 = vmatprep.subr.mxu0 0.0
    %134 = vmatpush1.msra.mxu0 0.0
    %135 = vmatprep.subr.mxu0 0.0
    %136 = vmatpush1.msra.mxu0 0.0
    %137 = vmatprep.subr.mxu0 0.0
    %138 = vmatpush1.msra.mxu0 0.0
    %139 = vmatprep.subr.mxu0 0.0
    %140 = vmatpush1.msra.mxu0 0.0
    %141 = vmatprep.subr.mxu0 0.0
    %142 = vmatpush1.msra.mxu0 0.0
    %143 = vmatprep.subr.mxu0 0.0
    %144 = vmatpush1.msra.mxu0 0.0
    %145 = vmatprep.subr.mxu0 0.0
    %146 = vmatpush1.msra.mxu0 0.0
    %147 = vmatprep.subr.mxu0 0.0
    %148 = vmatpush1.msra.mxu0 0.0
    %149 = vmatprep.subr.mxu0 0.0
    %150 = vmatpush1.msra.mxu0 0.0
    %151 = vmatprep.subr.mxu0 0.0
    %152 = vmatpush1.msra.mxu0 0.0
    %153 = vmatprep.subr.mxu0 0.0
    %154 = vmatpush1.msra.mxu0 0.0
    %155 = vmatprep.subr.mxu0 0.0
    %156 = vmatpush1.msra.mxu0 0.0
    %157 = vmatprep.subr.mxu0 0.0
    %158 = vmatpush1.msra.mxu0 0.0
    %159 = vmatprep.subr.mxu0 0.0
    %160 = vmatpush1.msra.mxu0 0.0
    %161 = vmatprep.subr.mxu0 0.0
    %162 = vmatpush1.msra.mxu0 0.0
    %163 = vmatprep.subr.mxu0 0.0
    %164 = vmatpush1.msra.mxu0 0.0
    %165 = vmatprep.subr.mxu0 0.0
    %166 = vmatpush1.msra.mxu0 0.0
    %167 = vmatprep.subr.mxu0 0.0
    %168 = vmatpush1.msra.mxu0 0.0
    %169 = vmatprep.mubr.f32.mxu0 0.0
    %170 = vmatmul.mubr.f32.gmra.mrb[0].mxu0 %v78
    %v171 = vpop.f32.mrb[0].mxu0
    %v172 = vadd.f32 %v74, %v171
    %v173 = vpop.f32.mrb[0].mxu0
    %174 = vmatprep.mubr.f32.mxu0 0.0
    %175 = vmatmul.mubr.f32.gmra.mrb[0].mxu0 %v81
    %v176 = vpop.f32.mrb[0].mxu0
    %v177 = vadd.f32 %v74, %v176
    %v178 = vpop.f32.mrb[0].mxu0
    %179 = vmatprep.mubr.f32.mxu0 0.0
    %180 = vmatmul.mubr.f32.gmra.mrb[0].mxu0 %v84
    %v181 = vpop.f32.mrb[0].mxu0
    %v182 = vadd.f32 %v74, %v181
    %v183 = vpop.f32.mrb[0].mxu0
    %184 = vmatprep.mubr.f32.mxu0 0.0
    %185 = vmatmul.mubr.f32.gmra.mrb[0].mxu0 %v87
    %v186 = vpop.f32.mrb[0].mxu0
    %v187 = vadd.f32 %v74, %v186
    %v188 = vpop.f32.mrb[0].mxu0
    %189 = vmatprep.mubr.f32.mxu0 0.0
    %190 = vmatmul.mubr.f32.gmra.mrb[0].mxu0 %v90
    %v191 = vpop.f32.mrb[0].mxu0
    %v192 = vadd.f32 %v74, %v191
    %v193 = vpop.f32.mrb[0].mxu0
    %194 = vmatprep.mubr.f32.mxu0 0.0
    %195 = vmatmul.mubr.f32.gmra.mrb[0].mxu0 %v93
    %v196 = vpop.f32.mrb[0].mxu0
    %v197 = vadd.f32 %v74, %v196
    %v198 = vpop.f32.mrb[0].mxu0
    %199 = vmatprep.mubr.f32.mxu0 0.0
    %200 = vmatmul.mubr.f32.gmra.mrb[0].mxu0 %v96
    %v201 = vpop.f32.mrb[0].mxu0
    %v202 = vadd.f32 %v74, %v201
    %v203 = vpop.f32.mrb[0].mxu0
    %204 = vmatprep.mubr.f32.mxu0 0.0
    %205 = vmatmul.mubr.f32.gmra.mrb[0].mxu0 %v99
    %v206 = vpop.f32.mrb[0].mxu0
    %v207 = vadd.f32 %v74, %v206
    %v208 = vpop.f32.mrb[0].mxu0
    %209 = vdwg.mxu0
    %210 = vst [vmem:[#allocation4] sm:$0xff] %v172
    %211 = vst [vmem:[#allocation4 + $0x8] sm:$0xff] %v177
    %212 = vst [vmem:[#allocation4 + $0x10] sm:$0xff] %v182
    %213 = vst [vmem:[#allocation4 + $0x18] sm:$0xff] %v187
    %214 = vst [vmem:[#allocation4 + $0x20] sm:$0xff] %v192
    %215 = vst [vmem:[#allocation4 + $0x28] sm:$0xff] %v197
    %216 = vst [vmem:[#allocation4 + $0x30] sm:$0xff] %v202
    %217 = vst [vmem:[#allocation4 + $0x38] sm:$0xff] %v207
    %v218 = vld [vmem:[%s4] sm:$0xff]
    %v219 = vld [vmem:[%s4 + $0x8] sm:$0xff]
    %v220 = vld [vmem:[%s4 + $0x10] sm:$0xff]
    %v221 = vld [vmem:[%s4 + $0x18] sm:$0xff]
    %v222 = vld [vmem:[#allocation2] sm:$0xff]
    %v223 = vld [vmem:[#allocation3] sm:$0xff]
    %v224 = vld [vmem:[#allocation4] sm:$0xff]
    %vm225 = vcmask 261120
    %v227 = vsel %vm225, %v222, 0
    %229 = vmatprep.subr.mxu0 0.0
    %230 = vmatpush1.msra.mxu0 %v218
    %231 = vmatprep.subr.mxu0 0.0
    %232 = vmatpush1.msra.mxu0 %v219
    %233 = vmatprep.subr.mxu0 0.0
    %234 = vmatpush1.msra.mxu0 %v220
    %235 = vmatprep.subr.mxu0 0.0
    %236 = vmatpush1.msra.mxu0 %v221
    %237 = vmatprep.subr.mxu0 0.0
    %238 = vmatpush1.msra.mxu0 0.0
    %239 = vmatprep.subr.mxu0 0.0
    %240 = vmatpush1.msra.mxu0 0.0
    %241 = vmatprep.subr.mxu0 0.0
    %242 = vmatpush1.msra.mxu0 0.0
    %243 = vmatprep.subr.mxu0 0.0
    %244 = vmatpush1.msra.mxu0 0.0
    %245 = vmatprep.subr.mxu0 0.0
    %246 = vmatpush1.msra.mxu0 0.0
    %247 = vmatprep.subr.mxu0 0.0
    %248 = vmatpush1.msra.mxu0 0.0
    %249 = vmatprep.subr.mxu0 0.0
    %250 = vmatpush1.msra.mxu0 0.0
    %251 = vmatprep.subr.mxu0 0.0
    %252 = vmatpush1.msra.mxu0 0.0
    %253 = vmatprep.subr.mxu0 0.0
    %254 = vmatpush1.msra.mxu0 0.0
    %255 = vmatprep.subr.mxu0 0.0
    %256 = vmatpush1.msra.mxu0 0.0
    %257 = vmatprep.subr.mxu0 0.0
    %258 = vmatpush1.msra.mxu0 0.0
    %259 = vmatprep.subr.mxu0 0.0
    %260 = vmatpush1.msra.mxu0 0.0
    %261 = vmatprep.subr.mxu0 0.0
    %262 = vmatpush1.msra.mxu0 0.0
    %263 = vmatprep.subr.mxu0 0.0
    %264 = vmatpush1.msra.mxu0 0.0
    %265 = vmatprep.subr.mxu0 0.0
    %266 = vmatpush1.msra.mxu0 0.0
    %267 = vmatprep.subr.mxu0 0.0
    %268 = vmatpush1.msra.mxu0 0.0
    %269 = vmatprep.subr.mxu0 0.0
    %270 = vmatpush1.msra.mxu0 0.0
    %271 = vmatprep.subr.mxu0 0.0
    %272 = vmatpush1.msra.mxu0 0.0
    %273 = vmatprep.subr.mxu0 0.0
    %274 = vmatpush1.msra.mxu0 0.0
    %275 = vmatprep.subr.mxu0 0.0
    %276 = vmatpush1.msra.mxu0 0.0
    %277 = vmatprep.subr.mxu0 0.0
    %278 = vmatpush1.msra.mxu0 0.0
    %279 = vmatprep.subr.mxu0 0.0
    %280 = vmatpush1.msra.mxu0 0.0
    %281 = vmatprep.subr.mxu0 0.0
    %282 = vmatpush1.msra.mxu0 0.0
    %283 = vmatprep.subr.mxu0 0.0
    %284 = vmatpush1.msra.mxu0 0.0
    %285 = vmatprep.subr.mxu0 0.0
    %286 = vmatpush1.msra.mxu0 0.0
    %287 = vmatprep.subr.mxu0 0.0
    %288 = vmatpush1.msra.mxu0 0.0
    %289 = vmatprep.subr.mxu0 0.0
    %290 = vmatpush1.msra.mxu0 0.0
    %291 = vmatprep.subr.mxu0 0.0
    %292 = vmatpush1.msra.mxu0 0.0
    %293 = vmatprep.mubr.f32.mxu0 0.0
    %294 = vmatmul.mubr.f32.gmra.mrb[0].mxu0 %v227
    %v295 = vpop.f32.mrb[0].mxu0
    %v296 = vadd.f32 0.0, %v295
    %v297 = vpop.f32.mrb[0].mxu0
    %298 = vdwg.mxu0
    %v299 = vadd.f32 %v224, %v296
    %v300 = vmul.f32 %v299, %v59
    %v301 = vtanh.pop %v300
    %v302 = vadd.f32 %v301, 1.0
    %v303 = vmul.f32 %v302, 0.5
    %v304 = vsel %vm58, %v301, %v303
    %306 = vrot.lane.b32.xlu0 %v223, 32
    %v307 = vpop.permute.xlu0 %306
    %v309 = vmul.f32 %v304, %v307
    %311 = vrot.lane.b32.xlu0 %v304, 64
    %v312 = vpop.permute.xlu0 %311
    %v314 = vmul.f32 %v304, %v312
    %316 = vrot.lane.b32.xlu0 %v314, 32
    %v317 = vpop.permute.xlu0 %316
    %v319 = vadd.f32 %v309, %v317
    %v320 = vtanh.pop %v319
    %322 = vrot.lane.b32.xlu0 %v320, 64
    %v323 = vpop.permute.xlu0 %322
    %v325 = vmul.f32 %v304, %v323
    %327 = vrot.lane.b32.xlu0 %v325, 32
    %v328 = vpop.permute.xlu0 %327
    %330 = vst.msk [vmem:[#allocation5] sm:$0xff] %vm225, %v328
    %v331 = vld [vmem:[#allocation4 + $0x8] sm:$0xff]
    %v332 = vsel %vm225, %v328, 0
    %334 = vmatprep.subr.mxu0 0.0
    %335 = vmatpush1.msra.mxu0 %v218
    %336 = vmatprep.subr.mxu0 0.0
    %337 = vmatpush1.msra.mxu0 %v219
    %338 = vmatprep.subr.mxu0 0.0
    %339 = vmatpush1.msra.mxu0 %v220
    %340 = vmatprep.subr.mxu0 0.0
    %341 = vmatpush1.msra.mxu0 %v221
    %342 = vmatprep.subr.mxu0 0.0
    %343 = vmatpush1.msra.mxu0 0.0
    %344 = vmatprep.subr.mxu0 0.0
    %345 = vmatpush1.msra.mxu0 0.0
    %346 = vmatprep.subr.mxu0 0.0
    %347 = vmatpush1.msra.mxu0 0.0
    %348 = vmatprep.subr.mxu0 0.0
    %349 = vmatpush1.msra.mxu0 0.0
    %350 = vmatprep.subr.mxu0 0.0
    %351 = vmatpush1.msra.mxu0 0.0
    %352 = vmatprep.subr.mxu0 0.0
    %353 = vmatpush1.msra.mxu0 0.0
    %354 = vmatprep.subr.mxu0 0.0
    %355 = vmatpush1.msra.mxu0 0.0
    %356 = vmatprep.subr.mxu0 0.0
    %357 = vmatpush1.msra.mxu0 0.0
    %358 = vmatprep.subr.mxu0 0.0
    %359 = vmatpush1.msra.mxu0 0.0
    %360 = vmatprep.subr.mxu0 0.0
    %361 = vmatpush1.msra.mxu0 0.0
    %362 = vmatprep.subr.mxu0 0.0
    %363 = vmatpush1.msra.mxu0 0.0
    %364 = vmatprep.subr.mxu0 0.0
    %365 = vmatpush1.msra.mxu0 0.0
    %366 = vmatprep.subr.mxu0 0.0
    %367 = vmatpush1.msra.mxu0 0.0
    %368 = vmatprep.subr.mxu0 0.0
    %369 = vmatpush1.msra.mxu0 0.0
    %370 = vmatprep.subr.mxu0 0.0
    %371 = vmatpush1.msra.mxu0 0.0
    %372 = vmatprep.subr.mxu0 0.0
    %373 = vmatpush1.msra.mxu0 0.0
    %374 = vmatprep.subr.mxu0 0.0
    %375 = vmatpush1.msra.mxu0 0.0
    %376 = vmatprep.subr.mxu0 0.0
    %377 = vmatpush1.msra.mxu0 0.0
    %378 = vmatprep.subr.mxu0 0.0
    %379 = vmatpush1.msra.mxu0 0.0
    %380 = vmatprep.subr.mxu0 0.0
    %381 = vmatpush1.msra.mxu0 0.0
    %382 = vmatprep.subr.mxu0 0.0
    %383 = vmatpush1.msra.mxu0 0.0
    %384 = vmatprep.subr.mxu0 0.0
    %385 = vmatpush1.msra.mxu0 0.0
    %386 = vmatprep.subr.mxu0 0.0
    %387 = vmatpush1.msra.mxu0 0.0
    %388 = vmatprep.subr.mxu0 0.0
    %389 = vmatpush1.msra.mxu0 0.0
    %390 = vmatprep.subr.mxu0 0.0
    %391 = vmatpush1.msra.mxu0 0.0
    %392 = vmatprep.subr.mxu0 0.0
    %393 = vmatpush1.msra.mxu0 0.0
    %394 = vmatprep.subr.mxu0 0.0
    %395 = vmatpush1.msra.mxu0 0.0
    %396 = vmatprep.subr.mxu0 0.0
    %397 = vmatpush1.msra.mxu0 0.0
    %398 = vmatprep.mubr.f32.mxu0 0.0
    %399 = vmatmul.mubr.f32.gmra.mrb[0].mxu0 %v332
    %v400 = vpop.f32.mrb[0].mxu0
    %v401 = vadd.f32 0.0, %v400
    %v402 = vpop.f32.mrb[0].mxu0
    %403 = vdwg.mxu0
    %v404 = vadd.f32 %v331, %v401
    %v405 = vmul.f32 %v404, %v59
    %v406 = vtanh.pop %v405
    %v407 = vadd.f32 %v406, 1.0
    %v408 = vmul.f32 %v407, 0.5
    %v409 = vsel %vm58, %v406, %v408
    %v410 = vmul.f32 %v409, %v319
    %412 = vrot.lane.b32.xlu0 %v409, 64
    %v413 = vpop.permute.xlu0 %412
    %v415 = vmul.f32 %v409, %v413
    %417 = vrot.lane.b32.xlu0 %v415, 32
    %v418 = vpop.permute.xlu0 %417
    %v420 = vadd.f32 %v410, %v418
    %v421 = vtanh.pop %v420
    %423 = vrot.lane.b32.xlu0 %v421, 64
    %v424 = vpop.permute.xlu0 %423
    %v426 = vmul.f32 %v409, %v424
    %428 = vrot.lane.b32.xlu0 %v426, 32
    %v429 = vpop.permute.xlu0 %428
    %431 = vst.msk [vmem:[#allocation5 + $0x8] sm:$0xff] %vm225, %v429
    %v432 = vld [vmem:[#allocation4 + $0x10] sm:$0xff]
    %v433 = vsel %vm225, %v429, 0
    %435 = vmatprep.subr.mxu0 0.0
    %436 = vmatpush1.msra.mxu0 %v218
    %437 = vmatprep.subr.mxu0 0.0
    %438 = vmatpush1.msra.mxu0 %v219
    %439 = vmatprep.subr.mxu0 0.0
    %440 = vmatpush1.msra.mxu0 %v220
    %441 = vmatprep.subr.mxu0 0.0
    %442 = vmatpush1.msra.mxu0 %v221
    %443 = vmatprep.subr.mxu0 0.0
    %444 = vmatpush1.msra.mxu0 0.0
    %445 = vmatprep.subr.mxu0 0.0
    %446 = vmatpush1.msra.mxu0 0.0
    %447 = vmatprep.subr.mxu0 0.0
    %448 = vmatpush1.msra.mxu0 0.0
    %449 = vmatprep.subr.mxu0 0.0
    %450 = vmatpush1.msra.mxu0 0.0
    %451 = vmatprep.subr.mxu0 0.0
    %452 = vmatpush1.msra.mxu0 0.0
    %453 = vmatprep.subr.mxu0 0.0
    %454 = vmatpush1.msra.mxu0 0.0
    %455 = vmatprep.subr.mxu0 0.0
    %456 = vmatpush1.msra.mxu0 0.0
    %457 = vmatprep.subr.mxu0 0.0
    %458 = vmatpush1.msra.mxu0 0.0
    %459 = vmatprep.subr.mxu0 0.0
    %460 = vmatpush1.msra.mxu0 0.0
    %461 = vmatprep.subr.mxu0 0.0
    %462 = vmatpush1.msra.mxu0 0.0
    %463 = vmatprep.subr.mxu0 0.0
    %464 = vmatpush1.msra.mxu0 0.0
    %465 = vmatprep.subr.mxu0 0.0
    %466 = vmatpush1.msra.mxu0 0.0
    %467 = vmatprep.subr.mxu0 0.0
    %468 = vmatpush1.msra.mxu0 0.0
    %469 = vmatprep.subr.mxu0 0.0
    %470 = vmatpush1.msra.mxu0 0.0
    %471 = vmatprep.subr.mxu0 0.0
    %472 = vmatpush1.msra.mxu0 0.0
    %473 = vmatprep.subr.mxu0 0.0
    %474 = vmatpush1.msra.mxu0 0.0
    %475 = vmatprep.subr.mxu0 0.0
    %476 = vmatpush1.msra.mxu0 0.0
    %477 = vmatprep.subr.mxu0 0.0
    %478 = vmatpush1.msra.mxu0 0.0
    %479 = vmatprep.subr.mxu0 0.0
    %480 = vmatpush1.msra.mxu0 0.0
    %481 = vmatprep.subr.mxu0 0.0
    %482 = vmatpush1.msra.mxu0 0.0
    %483 = vmatprep.subr.mxu0 0.0
    %484 = vmatpush1.msra.mxu0 0.0
    %485 = vmatprep.subr.mxu0 0.0
    %486 = vmatpush1.msra.mxu0 0.0
    %487 = vmatprep.subr.mxu0 0.0
    %488 = vmatpush1.msra.mxu0 0.0
    %489 = vmatprep.subr.mxu0 0.0
    %490 = vmatpush1.msra.mxu0 0.0
    %491 = vmatprep.subr.mxu0 0.0
    %492 = vmatpush1.msra.mxu0 0.0
    %493 = vmatprep.subr.mxu0 0.0
    %494 = vmatpush1.msra.mxu0 0.0
    %495 = vmatprep.subr.mxu0 0.0
    %496 = vmatpush1.msra.mxu0 0.0
    %497 = vmatprep.subr.mxu0 0.0
    %498 = vmatpush1.msra.mxu0 0.0
    %499 = vmatprep.mubr.f32.mxu0 0.0
    %500 = vmatmul.mubr.f32.gmra.mrb[0].mxu0 %v433
    %v501 = vpop.f32.mrb[0].mxu0
    %v502 = vadd.f32 0.0, %v501
    %v503 = vpop.f32.mrb[0].mxu0
    %504 = vdwg.mxu0
    %v505 = vadd.f32 %v432, %v502
    %v506 = vmul.f32 %v505, %v59
    %v507 = vtanh.pop %v506
    %v508 = vadd.f32 %v507, 1.0
    %v509 = vmul.f32 %v508, 0.5
    %v510 = vsel %vm58, %v507, %v509
    %v511 = vmul.f32 %v510, %v420
    %513 = vrot.lane.b32.xlu0 %v510, 64
    %v514 = vpop.permute.xlu0 %513
    %v516 = vmul.f32 %v510, %v514
    %518 = vrot.lane.b32.xlu0 %v516, 32
    %v519 = vpop.permute.xlu0 %518
    %v521 = vadd.f32 %v511, %v519
    %v522 = vtanh.pop %v521
    %524 = vrot.lane.b32.xlu0 %v522, 64
    %v525 = vpop.permute.xlu0 %524
    %v527 = vmul.f32 %v510, %v525
    %529 = vrot.lane.b32.xlu0 %v527, 32
    %v530 = vpop.permute.xlu0 %529
    %532 = vst.msk [vmem:[#allocation5 + $0x10] sm:$0xff] %vm225, %v530
    %v533 = vld [vmem:[#allocation4 + $0x18] sm:$0xff]
    %v534 = vsel %vm225, %v530, 0
    %536 = vmatprep.subr.mxu0 0.0
    %537 = vmatpush1.msra.mxu0 %v218
    %538 = vmatprep.subr.mxu0 0.0
    %539 = vmatpush1.msra.mxu0 %v219
    %540 = vmatprep.subr.mxu0 0.0
    %541 = vmatpush1.msra.mxu0 %v220
    %542 = vmatprep.subr.mxu0 0.0
    %543 = vmatpush1.msra.mxu0 %v221
    %544 = vmatprep.subr.mxu0 0.0
    %545 = vmatpush1.msra.mxu0 0.0
    %546 = vmatprep.subr.mxu0 0.0
    %547 = vmatpush1.msra.mxu0 0.0
    %548 = vmatprep.subr.mxu0 0.0
    %549 = vmatpush1.msra.mxu0 0.0
    %550 = vmatprep.subr.mxu0 0.0
    %551 = vmatpush1.msra.mxu0 0.0
    %552 = vmatprep.subr.mxu0 0.0
    %553 = vmatpush1.msra.mxu0 0.0
    %554 = vmatprep.subr.mxu0 0.0
    %555 = vmatpush1.msra.mxu0 0.0
    %556 = vmatprep.subr.mxu0 0.0
    %557 = vmatpush1.msra.mxu0 0.0
    %558 = vmatprep.subr.mxu0 0.0
    %559 = vmatpush1.msra.mxu0 0.0
    %560 = vmatprep.subr.mxu0 0.0
    %561 = vmatpush1.msra.mxu0 0.0
    %562 = vmatprep.subr.mxu0 0.0
    %563 = vmatpush1.msra.mxu0 0.0
    %564 = vmatprep.subr.mxu0 0.0
    %565 = vmatpush1.msra.mxu0 0.0
    %566 = vmatprep.subr.mxu0 0.0
    %567 = vmatpush1.msra.mxu0 0.0
    %568 = vmatprep.subr.mxu0 0.0
    %569 = vmatpush1.msra.mxu0 0.0
    %570 = vmatprep.subr.mxu0 0.0
    %571 = vmatpush1.msra.mxu0 0.0
    %572 = vmatprep.subr.mxu0 0.0
    %573 = vmatpush1.msra.mxu0 0.0
    %574 = vmatprep.subr.mxu0 0.0
    %575 = vmatpush1.msra.mxu0 0.0
    %576 = vmatprep.subr.mxu0 0.0
    %577 = vmatpush1.msra.mxu0 0.0
    %578 = vmatprep.subr.mxu0 0.0
    %579 = vmatpush1.msra.mxu0 0.0
    %580 = vmatprep.subr.mxu0 0.0
    %581 = vmatpush1.msra.mxu0 0.0
    %582 = vmatprep.subr.mxu0 0.0
    %583 = vmatpush1.msra.mxu0 0.0
    %584 = vmatprep.subr.mxu0 0.0
    %585 = vmatpush1.msra.mxu0 0.0
    %586 = vmatprep.subr.mxu0 0.0
    %587 = vmatpush1.msra.mxu0 0.0
    %588 = vmatprep.subr.mxu0 0.0
    %589 = vmatpush1.msra.mxu0 0.0
    %590 = vmatprep.subr.mxu0 0.0
    %591 = vmatpush1.msra.mxu0 0.0
    %592 = vmatprep.subr.mxu0 0.0
    %593 = vmatpush1.msra.mxu0 0.0
    %594 = vmatprep.subr.mxu0 0.0
    %595 = vmatpush1.msra.mxu0 0.0
    %596 = vmatprep.subr.mxu0 0.0
    %597 = vmatpush1.msra.mxu0 0.0
    %598 = vmatprep.subr.mxu0 0.0
    %599 = vmatpush1.msra.mxu0 0.0
    %600 = vmatprep.mubr.f32.mxu0 0.0
    %601 = vmatmul.mubr.f32.gmra.mrb[0].mxu0 %v534
    %v602 = vpop.f32.mrb[0].mxu0
    %v603 = vadd.f32 0.0, %v602
    %v604 = vpop.f32.mrb[0].mxu0
    %605 = vdwg.mxu0
    %v606 = vadd.f32 %v533, %v603
    %v607 = vmul.f32 %v606, %v59
    %v608 = vtanh.pop %v607
    %v609 = vadd.f32 %v608, 1.0
    %v610 = vmul.f32 %v609, 0.5
    %v611 = vsel %vm58, %v608, %v610
    %v612 = vmul.f32 %v611, %v521
    %614 = vrot.lane.b32.xlu0 %v611, 64
    %v615 = vpop.permute.xlu0 %614
    %v617 = vmul.f32 %v611, %v615
    %619 = vrot.lane.b32.xlu0 %v617, 32
    %v620 = vpop.permute.xlu0 %619
    %v622 = vadd.f32 %v612, %v620
    %v623 = vtanh.pop %v622
    %625 = vrot.lane.b32.xlu0 %v623, 64
    %v626 = vpop.permute.xlu0 %625
    %v628 = vmul.f32 %v611, %v626
    %630 = vrot.lane.b32.xlu0 %v628, 32
    %v631 = vpop.permute.xlu0 %630
    %633 = vst.msk [vmem:[#allocation5 + $0x18] sm:$0xff] %vm225, %v631
    %v634 = vld [vmem:[#allocation4 + $0x20] sm:$0xff]
    %v635 = vsel %vm225, %v631, 0
    %637 = vmatprep.subr.mxu0 0.0
    %638 = vmatpush1.msra.mxu0 %v218
    %639 = vmatprep.subr.mxu0 0.0
    %640 = vmatpush1.msra.mxu0 %v219
    %641 = vmatprep.subr.mxu0 0.0
    %642 = vmatpush1.msra.mxu0 %v220
    %643 = vmatprep.subr.mxu0 0.0
    %644 = vmatpush1.msra.mxu0 %v221
    %645 = vmatprep.subr.mxu0 0.0
    %646 = vmatpush1.msra.mxu0 0.0
    %647 = vmatprep.subr.mxu0 0.0
    %648 = vmatpush1.msra.mxu0 0.0
    %649 = vmatprep.subr.mxu0 0.0
    %650 = vmatpush1.msra.mxu0 0.0
    %651 = vmatprep.subr.mxu0 0.0
    %652 = vmatpush1.msra.mxu0 0.0
    %653 = vmatprep.subr.mxu0 0.0
    %654 = vmatpush1.msra.mxu0 0.0
    %655 = vmatprep.subr.mxu0 0.0
    %656 = vmatpush1.msra.mxu0 0.0
    %657 = vmatprep.subr.mxu0 0.0
    %658 = vmatpush1.msra.mxu0 0.0
    %659 = vmatprep.subr.mxu0 0.0
    %660 = vmatpush1.msra.mxu0 0.0
    %661 = vmatprep.subr.mxu0 0.0
    %662 = vmatpush1.msra.mxu0 0.0
    %663 = vmatprep.subr.mxu0 0.0
    %664 = vmatpush1.msra.mxu0 0.0
    %665 = vmatprep.subr.mxu0 0.0
    %666 = vmatpush1.msra.mxu0 0.0
    %667 = vmatprep.subr.mxu0 0.0
    %668 = vmatpush1.msra.mxu0 0.0
    %669 = vmatprep.subr.mxu0 0.0
    %670 = vmatpush1.msra.mxu0 0.0
    %671 = vmatprep.subr.mxu0 0.0
    %672 = vmatpush1.msra.mxu0 0.0
    %673 = vmatprep.subr.mxu0 0.0
    %674 = vmatpush1.msra.mxu0 0.0
    %675 = vmatprep.subr.mxu0 0.0
    %676 = vmatpush1.msra.mxu0 0.0
    %677 = vmatprep.subr.mxu0 0.0
    %678 = vmatpush1.msra.mxu0 0.0
    %679 = vmatprep.subr.mxu0 0.0
    %680 = vmatpush1.msra.mxu0 0.0
    %681 = vmatprep.subr.mxu0 0.0
    %682 = vmatpush1.msra.mxu0 0.0
    %683 = vmatprep.subr.mxu0 0.0
    %684 = vmatpush1.msra.mxu0 0.0
    %685 = vmatprep.subr.mxu0 0.0
    %686 = vmatpush1.msra.mxu0 0.0
    %687 = vmatprep.subr.mxu0 0.0
    %688 = vmatpush1.msra.mxu0 0.0
    %689 = vmatprep.subr.mxu0 0.0
    %690 = vmatpush1.msra.mxu0 0.0
    %691 = vmatprep.subr.mxu0 0.0
    %692 = vmatpush1.msra.mxu0 0.0
    %693 = vmatprep.subr.mxu0 0.0
    %694 = vmatpush1.msra.mxu0 0.0
    %695 = vmatprep.subr.mxu0 0.0
    %696 = vmatpush1.msra.mxu0 0.0
    %697 = vmatprep.subr.mxu0 0.0
    %698 = vmatpush1.msra.mxu0 0.0
    %699 = vmatprep.subr.mxu0 0.0
    %700 = vmatpush1.msra.mxu0 0.0
    %701 = vmatprep.mubr.f32.mxu0 0.0
    %702 = vmatmul.mubr.f32.gmra.mrb[0].mxu0 %v635
    %v703 = vpop.f32.mrb[0].mxu0
    %v704 = vadd.f32 0.0, %v703
    %v705 = vpop.f32.mrb[0].mxu0
    %706 = vdwg.mxu0
    %v707 = vadd.f32 %v634, %v704
    %v708 = vmul.f32 %v707, %v59
    %v709 = vtanh.pop %v708
    %v710 = vadd.f32 %v709, 1.0
    %v711 = vmul.f32 %v710, 0.5
    %v712 = vsel %vm58, %v709, %v711
    %v713 = vmul.f32 %v712, %v622
    %715 = vrot.lane.b32.xlu0 %v712, 64
    %v716 = vpop.permute.xlu0 %715
    %v718 = vmul.f32 %v712, %v716
    %720 = vrot.lane.b32.xlu0 %v718, 32
    %v721 = vpop.permute.xlu0 %720
    %v723 = vadd.f32 %v713, %v721
    %v724 = vtanh.pop %v723
    %726 = vrot.lane.b32.xlu0 %v724, 64
    %v727 = vpop.permute.xlu0 %726
    %v729 = vmul.f32 %v712, %v727
    %731 = vrot.lane.b32.xlu0 %v729, 32
    %v732 = vpop.permute.xlu0 %731
    %734 = vst.msk [vmem:[#allocation5 + $0x20] sm:$0xff] %vm225, %v732
    %v735 = vld [vmem:[#allocation4 + $0x28] sm:$0xff]
    %v736 = vsel %vm225, %v732, 0
    %738 = vmatprep.subr.mxu0 0.0
    %739 = vmatpush1.msra.mxu0 %v218
    %740 = vmatprep.subr.mxu0 0.0
    %741 = vmatpush1.msra.mxu0 %v219
    %742 = vmatprep.subr.mxu0 0.0
    %743 = vmatpush1.msra.mxu0 %v220
    %744 = vmatprep.subr.mxu0 0.0
    %745 = vmatpush1.msra.mxu0 %v221
    %746 = vmatprep.subr.mxu0 0.0
    %747 = vmatpush1.msra.mxu0 0.0
    %748 = vmatprep.subr.mxu0 0.0
    %749 = vmatpush1.msra.mxu0 0.0
    %750 = vmatprep.subr.mxu0 0.0
    %751 = vmatpush1.msra.mxu0 0.0
    %752 = vmatprep.subr.mxu0 0.0
    %753 = vmatpush1.msra.mxu0 0.0
    %754 = vmatprep.subr.mxu0 0.0
    %755 = vmatpush1.msra.mxu0 0.0
    %756 = vmatprep.subr.mxu0 0.0
    %757 = vmatpush1.msra.mxu0 0.0
    %758 = vmatprep.subr.mxu0 0.0
    %759 = vmatpush1.msra.mxu0 0.0
    %760 = vmatprep.subr.mxu0 0.0
    %761 = vmatpush1.msra.mxu0 0.0
    %762 = vmatprep.subr.mxu0 0.0
    %763 = vmatpush1.msra.mxu0 0.0
    %764 = vmatprep.subr.mxu0 0.0
    %765 = vmatpush1.msra.mxu0 0.0
    %766 = vmatprep.subr.mxu0 0.0
    %767 = vmatpush1.msra.mxu0 0.0
    %768 = vmatprep.subr.mxu0 0.0
    %769 = vmatpush1.msra.mxu0 0.0
    %770 = vmatprep.subr.mxu0 0.0
    %771 = vmatpush1.msra.mxu0 0.0
    %772 = vmatprep.subr.mxu0 0.0
    %773 = vmatpush1.msra.mxu0 0.0
    %774 = vmatprep.subr.mxu0 0.0
    %775 = vmatpush1.msra.mxu0 0.0
    %776 = vmatprep.subr.mxu0 0.0
    %777 = vmatpush1.msra.mxu0 0.0
    %778 = vmatprep.subr.mxu0 0.0
    %779 = vmatpush1.msra.mxu0 0.0
    %780 = vmatprep.subr.mxu0 0.0
    %781 = vmatpush1.msra.mxu0 0.0
    %782 = vmatprep.subr.mxu0 0.0
    %783 = vmatpush1.msra.mxu0 0.0
    %784 = vmatprep.subr.mxu0 0.0
    %785 = vmatpush1.msra.mxu0 0.0
    %786 = vmatprep.subr.mxu0 0.0
    %787 = vmatpush1.msra.mxu0 0.0
    %788 = vmatprep.subr.mxu0 0.0
    %789 = vmatpush1.msra.mxu0 0.0
    %790 = vmatprep.subr.mxu0 0.0
    %791 = vmatpush1.msra.mxu0 0.0
    %792 = vmatprep.subr.mxu0 0.0
    %793 = vmatpush1.msra.mxu0 0.0
    %794 = vmatprep.subr.mxu0 0.0
    %795 = vmatpush1.msra.mxu0 0.0
    %796 = vmatprep.subr.mxu0 0.0
    %797 = vmatpush1.msra.mxu0 0.0
    %798 = vmatprep.subr.mxu0 0.0
    %799 = vmatpush1.msra.mxu0 0.0
    %800 = vmatprep.subr.mxu0 0.0
    %801 = vmatpush1.msra.mxu0 0.0
    %802 = vmatprep.mubr.f32.mxu0 0.0
    %803 = vmatmul.mubr.f32.gmra.mrb[0].mxu0 %v736
    %v804 = vpop.f32.mrb[0].mxu0
    %v805 = vadd.f32 0.0, %v804
    %v806 = vpop.f32.mrb[0].mxu0
    %807 = vdwg.mxu0
    %v808 = vadd.f32 %v735, %v805
    %v809 = vmul.f32 %v808, %v59
    %v810 = vtanh.pop %v809
    %v811 = vadd.f32 %v810, 1.0
    %v812 = vmul.f32 %v811, 0.5
    %v813 = vsel %vm58, %v810, %v812
    %v814 = vmul.f32 %v813, %v723
    %816 = vrot.lane.b32.xlu0 %v813, 64
    %v817 = vpop.permute.xlu0 %816
    %v819 = vmul.f32 %v813, %v817
    %821 = vrot.lane.b32.xlu0 %v819, 32
    %v822 = vpop.permute.xlu0 %821
    %v824 = vadd.f32 %v814, %v822
    %v825 = vtanh.pop %v824
    %827 = vrot.lane.b32.xlu0 %v825, 64
    %v828 = vpop.permute.xlu0 %827
    %v830 = vmul.f32 %v813, %v828
    %832 = vrot.lane.b32.xlu0 %v830, 32
    %v833 = vpop.permute.xlu0 %832
    %835 = vst.msk [vmem:[#allocation5 + $0x28] sm:$0xff] %vm225, %v833
    %v836 = vld [vmem:[#allocation4 + $0x30] sm:$0xff]
    %v837 = vsel %vm225, %v833, 0
    %839 = vmatprep.subr.mxu0 0.0
    %840 = vmatpush1.msra.mxu0 %v218
    %841 = vmatprep.subr.mxu0 0.0
    %842 = vmatpush1.msra.mxu0 %v219
    %843 = vmatprep.subr.mxu0 0.0
    %844 = vmatpush1.msra.mxu0 %v220
    %845 = vmatprep.subr.mxu0 0.0
    %846 = vmatpush1.msra.mxu0 %v221
    %847 = vmatprep.subr.mxu0 0.0
    %848 = vmatpush1.msra.mxu0 0.0
    %849 = vmatprep.subr.mxu0 0.0
    %850 = vmatpush1.msra.mxu0 0.0
    %851 = vmatprep.subr.mxu0 0.0
    %852 = vmatpush1.msra.mxu0 0.0
    %853 = vmatprep.subr.mxu0 0.0
    %854 = vmatpush1.msra.mxu0 0.0
    %855 = vmatprep.subr.mxu0 0.0
    %856 = vmatpush1.msra.mxu0 0.0
    %857 = vmatprep.subr.mxu0 0.0
    %858 = vmatpush1.msra.mxu0 0.0
    %859 = vmatprep.subr.mxu0 0.0
    %860 = vmatpush1.msra.mxu0 0.0
    %861 = vmatprep.subr.mxu0 0.0
    %862 = vmatpush1.msra.mxu0 0.0
    %863 = vmatprep.subr.mxu0 0.0
    %864 = vmatpush1.msra.mxu0 0.0
    %865 = vmatprep.subr.mxu0 0.0
    %866 = vmatpush1.msra.mxu0 0.0
    %867 = vmatprep.subr.mxu0 0.0
    %868 = vmatpush1.msra.mxu0 0.0
    %869 = vmatprep.subr.mxu0 0.0
    %870 = vmatpush1.msra.mxu0 0.0
    %871 = vmatprep.subr.mxu0 0.0
    %872 = vmatpush1.msra.mxu0 0.0
    %873 = vmatprep.subr.mxu0 0.0
    %874 = vmatpush1.msra.mxu0 0.0
    %875 = vmatprep.subr.mxu0 0.0
    %876 = vmatpush1.msra.mxu0 0.0
    %877 = vmatprep.subr.mxu0 0.0
    %878 = vmatpush1.msra.mxu0 0.0
    %879 = vmatprep.subr.mxu0 0.0
    %880 = vmatpush1.msra.mxu0 0.0
    %881 = vmatprep.subr.mxu0 0.0
    %882 = vmatpush1.msra.mxu0 0.0
    %883 = vmatprep.subr.mxu0 0.0
    %884 = vmatpush1.msra.mxu0 0.0
    %885 = vmatprep.subr.mxu0 0.0
    %886 = vmatpush1.msra.mxu0 0.0
    %887 = vmatprep.subr.mxu0 0.0
    %888 = vmatpush1.msra.mxu0 0.0
    %889 = vmatprep.subr.mxu0 0.0
    %890 = vmatpush1.msra.mxu0 0.0
    %891 = vmatprep.subr.mxu0 0.0
    %892 = vmatpush1.msra.mxu0 0.0
    %893 = vmatprep.subr.mxu0 0.0
    %894 = vmatpush1.msra.mxu0 0.0
    %895 = vmatprep.subr.mxu0 0.0
    %896 = vmatpush1.msra.mxu0 0.0
    %897 = vmatprep.subr.mxu0 0.0
    %898 = vmatpush1.msra.mxu0 0.0
    %899 = vmatprep.subr.mxu0 0.0
    %900 = vmatpush1.msra.mxu0 0.0
    %901 = vmatprep.subr.mxu0 0.0
    %902 = vmatpush1.msra.mxu0 0.0
    %903 = vmatprep.mubr.f32.mxu0 0.0
    %904 = vmatmul.mubr.f32.gmra.mrb[0].mxu0 %v837
    %v905 = vpop.f32.mrb[0].mxu0
    %v906 = vadd.f32 0.0, %v905
    %v907 = vpop.f32.mrb[0].mxu0
    %908 = vdwg.mxu0
    %v909 = vadd.f32 %v836, %v906
    %v910 = vmul.f32 %v909, %v59
    %v911 = vtanh.pop %v910
    %v912 = vadd.f32 %v911, 1.0
    %v913 = vmul.f32 %v912, 0.5
    %v914 = vsel %vm58, %v911, %v913
    %v915 = vmul.f32 %v914, %v824
    %917 = vrot.lane.b32.xlu0 %v914, 64
    %v918 = vpop.permute.xlu0 %917
    %v920 = vmul.f32 %v914, %v918
    %922 = vrot.lane.b32.xlu0 %v920, 32
    %v923 = vpop.permute.xlu0 %922
    %v925 = vadd.f32 %v915, %v923
    %v926 = vtanh.pop %v925
    %928 = vrot.lane.b32.xlu0 %v926, 64
    %v929 = vpop.permute.xlu0 %928
    %v931 = vmul.f32 %v914, %v929
    %933 = vrot.lane.b32.xlu0 %v931, 32
    %v934 = vpop.permute.xlu0 %933
    %936 = vst.msk [vmem:[#allocation5 + $0x30] sm:$0xff] %vm225, %v934
    %v937 = vld [vmem:[#allocation4 + $0x38] sm:$0xff]
    %v938 = vsel %vm225, %v934, 0
    %940 = vmatprep.subr.mxu0 0.0
    %941 = vmatpush1.msra.mxu0 %v218
    %942 = vmatprep.subr.mxu0 0.0
    %943 = vmatpush1.msra.mxu0 %v219
    %944 = vmatprep.subr.mxu0 0.0
    %945 = vmatpush1.msra.mxu0 %v220
    %946 = vmatprep.subr.mxu0 0.0
    %947 = vmatpush1.msra.mxu0 %v221
    %948 = vmatprep.subr.mxu0 0.0
    %949 = vmatpush1.msra.mxu0 0.0
    %950 = vmatprep.subr.mxu0 0.0
    %951 = vmatpush1.msra.mxu0 0.0
    %952 = vmatprep.subr.mxu0 0.0
    %953 = vmatpush1.msra.mxu0 0.0
    %954 = vmatprep.subr.mxu0 0.0
    %955 = vmatpush1.msra.mxu0 0.0
    %956 = vmatprep.subr.mxu0 0.0
    %957 = vmatpush1.msra.mxu0 0.0
    %958 = vmatprep.subr.mxu0 0.0
    %959 = vmatpush1.msra.mxu0 0.0
    %960 = vmatprep.subr.mxu0 0.0
    %961 = vmatpush1.msra.mxu0 0.0
    %962 = vmatprep.subr.mxu0 0.0
    %963 = vmatpush1.msra.mxu0 0.0
    %964 = vmatprep.subr.mxu0 0.0
    %965 = vmatpush1.msra.mxu0 0.0
    %966 = vmatprep.subr.mxu0 0.0
    %967 = vmatpush1.msra.mxu0 0.0
    %968 = vmatprep.subr.mxu0 0.0
    %969 = vmatpush1.msra.mxu0 0.0
    %970 = vmatprep.subr.mxu0 0.0
    %971 = vmatpush1.msra.mxu0 0.0
    %972 = vmatprep.subr.mxu0 0.0
    %973 = vmatpush1.msra.mxu0 0.0
    %974 = vmatprep.subr.mxu0 0.0
    %975 = vmatpush1.msra.mxu0 0.0
    %976 = vmatprep.subr.mxu0 0.0
    %977 = vmatpush1.msra.mxu0 0.0
    %978 = vmatprep.subr.mxu0 0.0
    %979 = vmatpush1.msra.mxu0 0.0
    %980 = vmatprep.subr.mxu0 0.0
    %981 = vmatpush1.msra.mxu0 0.0
    %982 = vmatprep.subr.mxu0 0.0
    %983 = vmatpush1.msra.mxu0 0.0
    %984 = vmatprep.subr.mxu0 0.0
    %985 = vmatpush1.msra.mxu0 0.0
    %986 = vmatprep.subr.mxu0 0.0
    %987 = vmatpush1.msra.mxu0 0.0
    %988 = vmatprep.subr.mxu0 0.0
    %989 = vmatpush1.msra.mxu0 0.0
    %990 = vmatprep.subr.mxu0 0.0
    %991 = vmatpush1.msra.mxu0 0.0
    %992 = vmatprep.subr.mxu0 0.0
    %993 = vmatpush1.msra.mxu0 0.0
    %994 = vmatprep.subr.mxu0 0.0
    %995 = vmatpush1.msra.mxu0 0.0
    %996 = vmatprep.subr.mxu0 0.0
    %997 = vmatpush1.msra.mxu0 0.0
    %998 = vmatprep.subr.mxu0 0.0
    %999 = vmatpush1.msra.mxu0 0.0
    %1000 = vmatprep.subr.mxu0 0.0
    %1001 = vmatpush1.msra.mxu0 0.0
    %1002 = vmatprep.subr.mxu0 0.0
    %1003 = vmatpush1.msra.mxu0 0.0
    %1004 = vmatprep.mubr.f32.mxu0 0.0
    %1005 = vmatmul.mubr.f32.gmra.mrb[0].mxu0 %v938
    %v1006 = vpop.f32.mrb[0].mxu0
    %v1007 = vadd.f32 0.0, %v1006
    %v1008 = vpop.f32.mrb[0].mxu0
    %1009 = vdwg.mxu0
    %v1010 = vadd.f32 %v937, %v1007
    %v1011 = vmul.f32 %v1010, %v59
    %v1012 = vtanh.pop %v1011
    %v1013 = vadd.f32 %v1012, 1.0
    %v1014 = vmul.f32 %v1013, 0.5
    %v1015 = vsel %vm58, %v1012, %v1014
    %v1016 = vmul.f32 %v1015, %v925
    %1018 = vrot.lane.b32.xlu0 %v1015, 64
    %v1019 = vpop.permute.xlu0 %1018
    %v1021 = vmul.f32 %v1015, %v1019
    %1023 = vrot.lane.b32.xlu0 %v1021, 32
    %v1024 = vpop.permute.xlu0 %1023
    %v1026 = vadd.f32 %v1016, %v1024
    %v1027 = vtanh.pop %v1026
    %1029 = vrot.lane.b32.xlu0 %v1027, 64
    %v1030 = vpop.permute.xlu0 %1029
    %v1032 = vmul.f32 %v1015, %v1030
    %1034 = vrot.lane.b32.xlu0 %v1032, 32
    %v1035 = vpop.permute.xlu0 %1034
    %1037 = vst.msk [vmem:[#allocation5 + $0x38] sm:$0xff] %vm225, %v1035
    %1038 = vst.msk [vmem:[#allocation2] sm:$0xff] %vm225, %v1035
    %1040 = vrot.lane.b32.xlu0 %v1026, 96
    %v1041 = vpop.permute.xlu0 %1040
    %1043 = vst.msk [vmem:[#allocation3] sm:$0xff] %vm225, %v1041
    %v1044 = vld [vmem:[#allocation5] sm:$0xff]
    %v1045 = vld [vmem:[#allocation5 + $0x8] sm:$0xff]
    %v1046 = vld [vmem:[#allocation5 + $0x10] sm:$0xff]
    %v1047 = vld [vmem:[#allocation5 + $0x18] sm:$0xff]
    %v1048 = vld [vmem:[#allocation5 + $0x20] sm:$0xff]
    %v1049 = vld [vmem:[#allocation5 + $0x28] sm:$0xff]
    %v1050 = vld [vmem:[#allocation5 + $0x30] sm:$0xff]
    %v1051 = vld [vmem:[#allocation5 + $0x38] sm:$0xff]
    %v1052 = vld [vmem:[#allocation7] sm:$0xff]
    %v1053 = vld [vmem:[#allocation7 + $0x8] sm:$0xff]
    %v1054 = vld [vmem:[#allocation7 + $0x10] sm:$0xff]
    %v1055 = vld [vmem:[#allocation7 + $0x18] sm:$0xff]
    %v1056 = vld [vmem:[%s5] sm:$0x1]
    %v1058 = vlaneseq
    %v1059 = vshrl.u32 %v1058, 7
    %v1060 = vsub.s32 0, %v1059
    %v1061 = vrot.slane %v1056, %v1060
    %v1064 = vsel %vm225, %v1044, 0
    %v1067 = vsel %vm225, %v1045, 0
    %v1070 = vsel %vm225, %v1046, 0
    %v1073 = vsel %vm225, %v1047, 0
    %v1076 = vsel %vm225, %v1048, 0
    %v1079 = vsel %vm225, %v1049, 0
    %v1082 = vsel %vm225, %v1050, 0
    %v1085 = vsel %vm225, %v1051, 0
    %1087 = vmatprep.subr.mxu0 0.0
    %1088 = vmatpush1.msra.mxu0 %v1052
    %1089 = vmatprep.subr.mxu0 0.0
    %1090 = vmatpush1.msra.mxu0 %v1053
    %1091 = vmatprep.subr.mxu0 0.0
    %1092 = vmatpush1.msra.mxu0 %v1054
    %1093 = vmatprep.subr.mxu0 0.0
    %1094 = vmatpush1.msra.mxu0 %v1055
    %1095 = vmatprep.subr.mxu0 0.0
    %1096 = vmatpush1.msra.mxu0 0.0
    %1097 = vmatprep.subr.mxu0 0.0
    %1098 = vmatpush1.msra.mxu0 0.0
    %1099 = vmatprep.subr.mxu0 0.0
    %1100 = vmatpush1.msra.mxu0 0.0
    %1101 = vmatprep.subr.mxu0 0.0
    %1102 = vmatpush1.msra.mxu0 0.0
    %1103 = vmatprep.subr.mxu0 0.0
    %1104 = vmatpush1.msra.mxu0 0.0
    %1105 = vmatprep.subr.mxu0 0.0
    %1106 = vmatpush1.msra.mxu0 0.0
    %1107 = vmatprep.subr.mxu0 0.0
    %1108 = vmatpush1.msra.mxu0 0.0
    %1109 = vmatprep.subr.mxu0 0.0
    %1110 = vmatpush1.msra.mxu0 0.0
    %1111 = vmatprep.subr.mxu0 0.0
    %1112 = vmatpush1.msra.mxu0 0.0
    %1113 = vmatprep.subr.mxu0 0.0
    %1114 = vmatpush1.msra.mxu0 0.0
    %1115 = vmatprep.subr.mxu0 0.0
    %1116 = vmatpush1.msra.mxu0 0.0
    %1117 = vmatprep.subr.mxu0 0.0
    %1118 = vmatpush1.msra.mxu0 0.0
    %1119 = vmatprep.subr.mxu0 0.0
    %1120 = vmatpush1.msra.mxu0 0.0
    %1121 = vmatprep.subr.mxu0 0.0
    %1122 = vmatpush1.msra.mxu0 0.0
    %1123 = vmatprep.subr.mxu0 0.0
    %1124 = vmatpush1.msra.mxu0 0.0
    %1125 = vmatprep.subr.mxu0 0.0
    %1126 = vmatpush1.msra.mxu0 0.0
    %1127 = vmatprep.subr.mxu0 0.0
    %1128 = vmatpush1.msra.mxu0 0.0
    %1129 = vmatprep.subr.mxu0 0.0
    %1130 = vmatpush1.msra.mxu0 0.0
    %1131 = vmatprep.subr.mxu0 0.0
    %1132 = vmatpush1.msra.mxu0 0.0
    %1133 = vmatprep.subr.mxu0 0.0
    %1134 = vmatpush1.msra.mxu0 0.0
    %1135 = vmatprep.subr.mxu0 0.0
    %1136 = vmatpush1.msra.mxu0 0.0
    %1137 = vmatprep.subr.mxu0 0.0
    %1138 = vmatpush1.msra.mxu0 0.0
    %1139 = vmatprep.subr.mxu0 0.0
    %1140 = vmatpush1.msra.mxu0 0.0
    %1141 = vmatprep.subr.mxu0 0.0
    %1142 = vmatpush1.msra.mxu0 0.0
    %1143 = vmatprep.subr.mxu0 0.0
    %1144 = vmatpush1.msra.mxu0 0.0
    %1145 = vmatprep.subr.mxu0 0.0
    %1146 = vmatpush1.msra.mxu0 0.0
    %1147 = vmatprep.subr.mxu0 0.0
    %1148 = vmatpush1.msra.mxu0 0.0
    %1149 = vmatprep.subr.mxu0 0.0
    %1150 = vmatpush1.msra.mxu0 0.0
    %1151 = vmatprep.mubr.f32.mxu0 0.0
    %1152 = vmatmul.mubr.f32.gmra.mrb[0].mxu0 %v1064
    %v1153 = vpop.f32.mrb[0].mxu0
    %v1154 = vadd.f32 %v1061, %v1153
    %v1155 = vpop.f32.mrb[0].mxu0
    %1156 = vmatprep.mubr.f32.mxu0 0.0
    %1157 = vmatmul.mubr.f32.gmra.mrb[0].mxu0 %v1067
    %v1158 = vpop.f32.mrb[0].mxu0
    %v1159 = vadd.f32 %v1061, %v1158
    %v1160 = vpop.f32.mrb[0].mxu0
    %1161 = vmatprep.mubr.f32.mxu0 0.0
    %1162 = vmatmul.mubr.f32.gmra.mrb[0].mxu0 %v1070
    %v1163 = vpop.f32.mrb[0].mxu0
    %v1164 = vadd.f32 %v1061, %v1163
    %v1165 = vpop.f32.mrb[0].mxu0
    %1166 = vmatprep.mubr.f32.mxu0 0.0
    %1167 = vmatmul.mubr.f32.gmra.mrb[0].mxu0 %v1073
    %v1168 = vpop.f32.mrb[0].mxu0
    %v1169 = vadd.f32 %v1061, %v1168
    %v1170 = vpop.f32.mrb[0].mxu0
    %1171 = vmatprep.mubr.f32.mxu0 0.0
    %1172 = vmatmul.mubr.f32.gmra.mrb[0].mxu0 %v1076
    %v1173 = vpop.f32.mrb[0].mxu0
    %v1174 = vadd.f32 %v1061, %v1173
    %v1175 = vpop.f32.mrb[0].mxu0
    %1176 = vmatprep.mubr.f32.mxu0 0.0
    %1177 = vmatmul.mubr.f32.gmra.mrb[0].mxu0 %v1079
    %v1178 = vpop.f32.mrb[0].mxu0
    %v1179 = vadd.f32 %v1061, %v1178
    %v1180 = vpop.f32.mrb[0].mxu0
    %1181 = vmatprep.mubr.f32.mxu0 0.0
    %1182 = vmatmul.mubr.f32.gmra.mrb[0].mxu0 %v1082
    %v1183 = vpop.f32.mrb[0].mxu0
    %v1184 = vadd.f32 %v1061, %v1183
    %v1185 = vpop.f32.mrb[0].mxu0
    %1186 = vmatprep.mubr.f32.mxu0 0.0
    %1187 = vmatmul.mubr.f32.gmra.mrb[0].mxu0 %v1085
    %v1188 = vpop.f32.mrb[0].mxu0
    %v1189 = vadd.f32 %v1061, %v1188
    %v1190 = vpop.f32.mrb[0].mxu0
    %1191 = vdwg.mxu0
    %1192 = vst [vmem:[#allocation4] sm:$0xff] %v1154
    %1193 = vst [vmem:[#allocation4 + $0x8] sm:$0xff] %v1159
    %1194 = vst [vmem:[#allocation4 + $0x10] sm:$0xff] %v1164
    %1195 = vst [vmem:[#allocation4 + $0x18] sm:$0xff] %v1169
    %1196 = vst [vmem:[#allocation4 + $0x20] sm:$0xff] %v1174
    %1197 = vst [vmem:[#allocation4 + $0x28] sm:$0xff] %v1179
    %1198 = vst [vmem:[#allocation4 + $0x30] sm:$0xff] %v1184
    %1199 = vst [vmem:[#allocation4 + $0x38] sm:$0xff] %v1189
    %s1200 = scalar_lea.vmem %s4, 32
    %v1201 = vld [vmem:[%s1200] sm:$0xff]
    %v1202 = vld [vmem:[%s1200 + $0x8] sm:$0xff]
    %v1203 = vld [vmem:[%s1200 + $0x10] sm:$0xff]
    %v1204 = vld [vmem:[%s1200 + $0x18] sm:$0xff]
    %s1205 = scalar_lea.vmem [#allocation2], 8
    %v1206 = vld [vmem:[%s1205] sm:$0xff]
    %s1207 = scalar_lea.vmem [#allocation3], 8
    %v1208 = vld [vmem:[%s1207] sm:$0xff]
    %v1209 = vld [vmem:[#allocation4] sm:$0xff]
    %v1211 = vsel %vm225, %v1206, 0
    %1213 = vmatprep.subr.mxu0 0.0
    %1214 = vmatpush1.msra.mxu0 %v1201
    %1215 = vmatprep.subr.mxu0 0.0
    %1216 = vmatpush1.msra.mxu0 %v1202
    %1217 = vmatprep.subr.mxu0 0.0
    %1218 = vmatpush1.msra.mxu0 %v1203
    %1219 = vmatprep.subr.mxu0 0.0
    %1220 = vmatpush1.msra.mxu0 %v1204
    %1221 = vmatprep.subr.mxu0 0.0
    %1222 = vmatpush1.msra.mxu0 0.0
    %1223 = vmatprep.subr.mxu0 0.0
    %1224 = vmatpush1.msra.mxu0 0.0
    %1225 = vmatprep.subr.mxu0 0.0
    %1226 = vmatpush1.msra.mxu0 0.0
    %1227 = vmatprep.subr.mxu0 0.0
    %1228 = vmatpush1.msra.mxu0 0.0
    %1229 = vmatprep.subr.mxu0 0.0
    %1230 = vmatpush1.msra.mxu0 0.0
    %1231 = vmatprep.subr.mxu0 0.0
    %1232 = vmatpush1.msra.mxu0 0.0
    %1233 = vmatprep.subr.mxu0 0.0
    %1234 = vmatpush1.msra.mxu0 0.0
    %1235 = vmatprep.subr.mxu0 0.0
    %1236 = vmatpush1.msra.mxu0 0.0
    %1237 = vmatprep.subr.mxu0 0.0
    %1238 = vmatpush1.msra.mxu0 0.0
    %1239 = vmatprep.subr.mxu0 0.0
    %1240 = vmatpush1.msra.mxu0 0.0
    %1241 = vmatprep.subr.mxu0 0.0
    %1242 = vmatpush1.msra.mxu0 0.0
    %1243 = vmatprep.subr.mxu0 0.0
    %1244 = vmatpush1.msra.mxu0 0.0
    %1245 = vmatprep.subr.mxu0 0.0
    %1246 = vmatpush1.msra.mxu0 0.0
    %1247 = vmatprep.subr.mxu0 0.0
    %1248 = vmatpush1.msra.mxu0 0.0
    %1249 = vmatprep.subr.mxu0 0.0
    %1250 = vmatpush1.msra.mxu0 0.0
    %1251 = vmatprep.subr.mxu0 0.0
    %1252 = vmatpush1.msra.mxu0 0.0
    %1253 = vmatprep.subr.mxu0 0.0
    %1254 = vmatpush1.msra.mxu0 0.0
    %1255 = vmatprep.subr.mxu0 0.0
    %1256 = vmatpush1.msra.mxu0 0.0
    %1257 = vmatprep.subr.mxu0 0.0
    %1258 = vmatpush1.msra.mxu0 0.0
    %1259 = vmatprep.subr.mxu0 0.0
    %1260 = vmatpush1.msra.mxu0 0.0
    %1261 = vmatprep.subr.mxu0 0.0
    %1262 = vmatpush1.msra.mxu0 0.0
    %1263 = vmatprep.subr.mxu0 0.0
    %1264 = vmatpush1.msra.mxu0 0.0
    %1265 = vmatprep.subr.mxu0 0.0
    %1266 = vmatpush1.msra.mxu0 0.0
    %1267 = vmatprep.subr.mxu0 0.0
    %1268 = vmatpush1.msra.mxu0 0.0
    %1269 = vmatprep.subr.mxu0 0.0
    %1270 = vmatpush1.msra.mxu0 0.0
    %1271 = vmatprep.subr.mxu0 0.0
    %1272 = vmatpush1.msra.mxu0 0.0
    %1273 = vmatprep.subr.mxu0 0.0
    %1274 = vmatpush1.msra.mxu0 0.0
    %1275 = vmatprep.subr.mxu0 0.0
    %1276 = vmatpush1.msra.mxu0 0.0
    %1277 = vmatprep.mubr.f32.mxu0 0.0
    %1278 = vmatmul.mubr.f32.gmra.mrb[0].mxu0 %v1211
    %v1279 = vpop.f32.mrb[0].mxu0
    %v1280 = vadd.f32 0.0, %v1279
    %v1281 = vpop.f32.mrb[0].mxu0
    %1282 = vdwg.mxu0
    %v1283 = vadd.f32 %v1209, %v1280
    %v1284 = vmul.f32 %v1283, %v59
    %v1285 = vtanh.pop %v1284
    %v1286 = vadd.f32 %v1285, 1.0
    %v1287 = vmul.f32 %v1286, 0.5
    %v1288 = vsel %vm58, %v1285, %v1287
    %1290 = vrot.lane.b32.xlu0 %v1208, 32
    %v1291 = vpop.permute.xlu0 %1290
    %v1293 = vmul.f32 %v1288, %v1291
    %1295 = vrot.lane.b32.xlu0 %v1288, 64
    %v1296 = vpop.permute.xlu0 %1295
    %v1298 = vmul.f32 %v1288, %v1296
    %1300 = vrot.lane.b32.xlu0 %v1298, 32
    %v1301 = vpop.permute.xlu0 %1300
    %v1303 = vadd.f32 %v1293, %v1301
    %v1304 = vtanh.pop %v1303
    %1306 = vrot.lane.b32.xlu0 %v1304, 64
    %v1307 = vpop.permute.xlu0 %1306
    %v1309 = vmul.f32 %v1288, %v1307
    %v1310 = vld [vmem:[#allocation4 + $0x8] sm:$0xff]
    %1312 = vrot.lane.b32.xlu0 %v1309, 32
    %v1313 = vpop.permute.xlu0 %1312
    %v1314 = vsel %vm225, %v1313, 0
    %1316 = vmatprep.subr.mxu0 0.0
    %1317 = vmatpush1.msra.mxu0 %v1201
    %1318 = vmatprep.subr.mxu0 0.0
    %1319 = vmatpush1.msra.mxu0 %v1202
    %1320 = vmatprep.subr.mxu0 0.0
    %1321 = vmatpush1.msra.mxu0 %v1203
    %1322 = vmatprep.subr.mxu0 0.0
    %1323 = vmatpush1.msra.mxu0 %v1204
    %1324 = vmatprep.subr.mxu0 0.0
    %1325 = vmatpush1.msra.mxu0 0.0
    %1326 = vmatprep.subr.mxu0 0.0
    %1327 = vmatpush1.msra.mxu0 0.0
    %1328 = vmatprep.subr.mxu0 0.0
    %1329 = vmatpush1.msra.mxu0 0.0
    %1330 = vmatprep.subr.mxu0 0.0
    %1331 = vmatpush1.msra.mxu0 0.0
    %1332 = vmatprep.subr.mxu0 0.0
    %1333 = vmatpush1.msra.mxu0 0.0
    %1334 = vmatprep.subr.mxu0 0.0
    %1335 = vmatpush1.msra.mxu0 0.0
    %1336 = vmatprep.subr.mxu0 0.0
    %1337 = vmatpush1.msra.mxu0 0.0
    %1338 = vmatprep.subr.mxu0 0.0
    %1339 = vmatpush1.msra.mxu0 0.0
    %1340 = vmatprep.subr.mxu0 0.0
    %1341 = vmatpush1.msra.mxu0 0.0
    %1342 = vmatprep.subr.mxu0 0.0
    %1343 = vmatpush1.msra.mxu0 0.0
    %1344 = vmatprep.subr.mxu0 0.0
    %1345 = vmatpush1.msra.mxu0 0.0
    %1346 = vmatprep.subr.mxu0 0.0
    %1347 = vmatpush1.msra.mxu0 0.0
    %1348 = vmatprep.subr.mxu0 0.0
    %1349 = vmatpush1.msra.mxu0 0.0
    %1350 = vmatprep.subr.mxu0 0.0
    %1351 = vmatpush1.msra.mxu0 0.0
    %1352 = vmatprep.subr.mxu0 0.0
    %1353 = vmatpush1.msra.mxu0 0.0
    %1354 = vmatprep.subr.mxu0 0.0
    %1355 = vmatpush1.msra.mxu0 0.0
    %1356 = vmatprep.subr.mxu0 0.0
    %1357 = vmatpush1.msra.mxu0 0.0
    %1358 = vmatprep.subr.mxu0 0.0
    %1359 = vmatpush1.msra.mxu0 0.0
    %1360 = vmatprep.subr.mxu0 0.0
    %1361 = vmatpush1.msra.mxu0 0.0
    %1362 = vmatprep.subr.mxu0 0.0
    %1363 = vmatpush1.msra.mxu0 0.0
    %1364 = vmatprep.subr.mxu0 0.0
    %1365 = vmatpush1.msra.mxu0 0.0
    %1366 = vmatprep.subr.mxu0 0.0
    %1367 = vmatpush1.msra.mxu0 0.0
    %1368 = vmatprep.subr.mxu0 0.0
    %1369 = vmatpush1.msra.mxu0 0.0
    %1370 = vmatprep.subr.mxu0 0.0
    %1371 = vmatpush1.msra.mxu0 0.0
    %1372 = vmatprep.subr.mxu0 0.0
    %1373 = vmatpush1.msra.mxu0 0.0
    %1374 = vmatprep.subr.mxu0 0.0
    %1375 = vmatpush1.msra.mxu0 0.0
    %1376 = vmatprep.subr.mxu0 0.0
    %1377 = vmatpush1.msra.mxu0 0.0
    %1378 = vmatprep.subr.mxu0 0.0
    %1379 = vmatpush1.msra.mxu0 0.0
    %1380 = vmatprep.mubr.f32.mxu0 0.0
    %1381 = vmatmul.mubr.f32.gmra.mrb[0].mxu0 %v1314
    %v1382 = vpop.f32.mrb[0].mxu0
    %v1383 = vadd.f32 0.0, %v1382
    %v1384 = vpop.f32.mrb[0].mxu0
    %1385 = vdwg.mxu0
    %v1386 = vadd.f32 %v1310, %v1383
    %v1387 = vmul.f32 %v1386, %v59
    %v1388 = vtanh.pop %v1387
    %v1389 = vadd.f32 %v1388, 1.0
    %v1390 = vmul.f32 %v1389, 0.5
    %v1391 = vsel %vm58, %v1388, %v1390
    %v1392 = vmul.f32 %v1391, %v1303
    %1394 = vrot.lane.b32.xlu0 %v1391, 64
    %v1395 = vpop.permute.xlu0 %1394
    %v1397 = vmul.f32 %v1391, %v1395
    %1399 = vrot.lane.b32.xlu0 %v1397, 32
    %v1400 = vpop.permute.xlu0 %1399
    %v1402 = vadd.f32 %v1392, %v1400
    %v1403 = vtanh.pop %v1402
    %1405 = vrot.lane.b32.xlu0 %v1403, 64
    %v1406 = vpop.permute.xlu0 %1405
    %v1408 = vmul.f32 %v1391, %v1406
    %v1409 = vld [vmem:[#allocation4 + $0x10] sm:$0xff]
    %1411 = vrot.lane.b32.xlu0 %v1408, 32
    %v1412 = vpop.permute.xlu0 %1411
    %v1413 = vsel %vm225, %v1412, 0
    %1415 = vmatprep.subr.mxu0 0.0
    %1416 = vmatpush1.msra.mxu0 %v1201
    %1417 = vmatprep.subr.mxu0 0.0
    %1418 = vmatpush1.msra.mxu0 %v1202
    %1419 = vmatprep.subr.mxu0 0.0
    %1420 = vmatpush1.msra.mxu0 %v1203
    %1421 = vmatprep.subr.mxu0 0.0
    %1422 = vmatpush1.msra.mxu0 %v1204
    %1423 = vmatprep.subr.mxu0 0.0
    %1424 = vmatpush1.msra.mxu0 0.0
    %1425 = vmatprep.subr.mxu0 0.0
    %1426 = vmatpush1.msra.mxu0 0.0
    %1427 = vmatprep.subr.mxu0 0.0
    %1428 = vmatpush1.msra.mxu0 0.0
    %1429 = vmatprep.subr.mxu0 0.0
    %1430 = vmatpush1.msra.mxu0 0.0
    %1431 = vmatprep.subr.mxu0 0.0
    %1432 = vmatpush1.msra.mxu0 0.0
    %1433 = vmatprep.subr.mxu0 0.0
    %1434 = vmatpush1.msra.mxu0 0.0
    %1435 = vmatprep.subr.mxu0 0.0
    %1436 = vmatpush1.msra.mxu0 0.0
    %1437 = vmatprep.subr.mxu0 0.0
    %1438 = vmatpush1.msra.mxu0 0.0
    %1439 = vmatprep.subr.mxu0 0.0
    %1440 = vmatpush1.msra.mxu0 0.0
    %1441 = vmatprep.subr.mxu0 0.0
    %1442 = vmatpush1.msra.mxu0 0.0
    %1443 = vmatprep.subr.mxu0 0.0
    %1444 = vmatpush1.msra.mxu0 0.0
    %1445 = vmatprep.subr.mxu0 0.0
    %1446 = vmatpush1.msra.mxu0 0.0
    %1447 = vmatprep.subr.mxu0 0.0
    %1448 = vmatpush1.msra.mxu0 0.0
    %1449 = vmatprep.subr.mxu0 0.0
    %1450 = vmatpush1.msra.mxu0 0.0
    %1451 = vmatprep.subr.mxu0 0.0
    %1452 = vmatpush1.msra.mxu0 0.0
    %1453 = vmatprep.subr.mxu0 0.0
    %1454 = vmatpush1.msra.mxu0 0.0
    %1455 = vmatprep.subr.mxu0 0.0
    %1456 = vmatpush1.msra.mxu0 0.0
    %1457 = vmatprep.subr.mxu0 0.0
    %1458 = vmatpush1.msra.mxu0 0.0
    %1459 = vmatprep.subr.mxu0 0.0
    %1460 = vmatpush1.msra.mxu0 0.0
    %1461 = vmatprep.subr.mxu0 0.0
    %1462 = vmatpush1.msra.mxu0 0.0
    %1463 = vmatprep.subr.mxu0 0.0
    %1464 = vmatpush1.msra.mxu0 0.0
    %1465 = vmatprep.subr.mxu0 0.0
    %1466 = vmatpush1.msra.mxu0 0.0
    %1467 = vmatprep.subr.mxu0 0.0
    %1468 = vmatpush1.msra.mxu0 0.0
    %1469 = vmatprep.subr.mxu0 0.0
    %1470 = vmatpush1.msra.mxu0 0.0
    %1471 = vmatprep.subr.mxu0 0.0
    %1472 = vmatpush1.msra.mxu0 0.0
    %1473 = vmatprep.subr.mxu0 0.0
    %1474 = vmatpush1.msra.mxu0 0.0
    %1475 = vmatprep.subr.mxu0 0.0
    %1476 = vmatpush1.msra.mxu0 0.0
    %1477 = vmatprep.subr.mxu0 0.0
    %1478 = vmatpush1.msra.mxu0 0.0
    %1479 = vmatprep.mubr.f32.mxu0 0.0
    %1480 = vmatmul.mubr.f32.gmra.mrb[0].mxu0 %v1413
    %v1481 = vpop.f32.mrb[0].mxu0
    %v1482 = vadd.f32 0.0, %v1481
    %v1483 = vpop.f32.mrb[0].mxu0
    %1484 = vdwg.mxu0
    %v1485 = vadd.f32 %v1409, %v1482
    %v1486 = vmul.f32 %v1485, %v59
    %v1487 = vtanh.pop %v1486
    %v1488 = vadd.f32 %v1487, 1.0
    %v1489 = vmul.f32 %v1488, 0.5
    %v1490 = vsel %vm58, %v1487, %v1489
    %v1491 = vmul.f32 %v1490, %v1402
    %1493 = vrot.lane.b32.xlu0 %v1490, 64
    %v1494 = vpop.permute.xlu0 %1493
    %v1496 = vmul.f32 %v1490, %v1494
    %1498 = vrot.lane.b32.xlu0 %v1496, 32
    %v1499 = vpop.permute.xlu0 %1498
    %v1501 = vadd.f32 %v1491, %v1499
    %v1502 = vtanh.pop %v1501
    %1504 = vrot.lane.b32.xlu0 %v1502, 64
    %v1505 = vpop.permute.xlu0 %1504
    %v1507 = vmul.f32 %v1490, %v1505
    %v1508 = vld [vmem:[#allocation4 + $0x18] sm:$0xff]
    %1510 = vrot.lane.b32.xlu0 %v1507, 32
    %v1511 = vpop.permute.xlu0 %1510
    %v1512 = vsel %vm225, %v1511, 0
    %1514 = vmatprep.subr.mxu0 0.0
    %1515 = vmatpush1.msra.mxu0 %v1201
    %1516 = vmatprep.subr.mxu0 0.0
    %1517 = vmatpush1.msra.mxu0 %v1202
    %1518 = vmatprep.subr.mxu0 0.0
    %1519 = vmatpush1.msra.mxu0 %v1203
    %1520 = vmatprep.subr.mxu0 0.0
    %1521 = vmatpush1.msra.mxu0 %v1204
    %1522 = vmatprep.subr.mxu0 0.0
    %1523 = vmatpush1.msra.mxu0 0.0
    %1524 = vmatprep.subr.mxu0 0.0
    %1525 = vmatpush1.msra.mxu0 0.0
    %1526 = vmatprep.subr.mxu0 0.0
    %1527 = vmatpush1.msra.mxu0 0.0
    %1528 = vmatprep.subr.mxu0 0.0
    %1529 = vmatpush1.msra.mxu0 0.0
    %1530 = vmatprep.subr.mxu0 0.0
    %1531 = vmatpush1.msra.mxu0 0.0
    %1532 = vmatprep.subr.mxu0 0.0
    %1533 = vmatpush1.msra.mxu0 0.0
    %1534 = vmatprep.subr.mxu0 0.0
    %1535 = vmatpush1.msra.mxu0 0.0
    %1536 = vmatprep.subr.mxu0 0.0
    %1537 = vmatpush1.msra.mxu0 0.0
    %1538 = vmatprep.subr.mxu0 0.0
    %1539 = vmatpush1.msra.mxu0 0.0
    %1540 = vmatprep.subr.mxu0 0.0
    %1541 = vmatpush1.msra.mxu0 0.0
    %1542 = vmatprep.subr.mxu0 0.0
    %1543 = vmatpush1.msra.mxu0 0.0
    %1544 = vmatprep.subr.mxu0 0.0
    %1545 = vmatpush1.msra.mxu0 0.0
    %1546 = vmatprep.subr.mxu0 0.0
    %1547 = vmatpush1.msra.mxu0 0.0
    %1548 = vmatprep.subr.mxu0 0.0
    %1549 = vmatpush1.msra.mxu0 0.0
    %1550 = vmatprep.subr.mxu0 0.0
    %1551 = vmatpush1.msra.mxu0 0.0
    %1552 = vmatprep.subr.mxu0 0.0
    %1553 = vmatpush1.msra.mxu0 0.0
    %1554 = vmatprep.subr.mxu0 0.0
    %1555 = vmatpush1.msra.mxu0 0.0
    %1556 = vmatprep.subr.mxu0 0.0
    %1557 = vmatpush1.msra.mxu0 0.0
    %1558 = vmatprep.subr.mxu0 0.0
    %1559 = vmatpush1.msra.mxu0 0.0
    %1560 = vmatprep.subr.mxu0 0.0
    %1561 = vmatpush1.msra.mxu0 0.0
    %1562 = vmatprep.subr.mxu0 0.0
    %1563 = vmatpush1.msra.mxu0 0.0
    %1564 = vmatprep.subr.mxu0 0.0
    %1565 = vmatpush1.msra.mxu0 0.0
    %1566 = vmatprep.subr.mxu0 0.0
    %1567 = vmatpush1.msra.mxu0 0.0
    %1568 = vmatprep.subr.mxu0 0.0
    %1569 = vmatpush1.msra.mxu0 0.0
    %1570 = vmatprep.subr.mxu0 0.0
    %1571 = vmatpush1.msra.mxu0 0.0
    %1572 = vmatprep.subr.mxu0 0.0
    %1573 = vmatpush1.msra.mxu0 0.0
    %1574 = vmatprep.subr.mxu0 0.0
    %1575 = vmatpush1.msra.mxu0 0.0
    %1576 = vmatprep.subr.mxu0 0.0
    %1577 = vmatpush1.msra.mxu0 0.0
    %1578 = vmatprep.mubr.f32.mxu0 0.0
    %1579 = vmatmul.mubr.f32.gmra.mrb[0].mxu0 %v1512
    %v1580 = vpop.f32.mrb[0].mxu0
    %v1581 = vadd.f32 0.0, %v1580
    %v1582 = vpop.f32.mrb[0].mxu0
    %1583 = vdwg.mxu0
    %v1584 = vadd.f32 %v1508, %v1581
    %v1585 = vmul.f32 %v1584, %v59
    %v1586 = vtanh.pop %v1585
    %v1587 = vadd.f32 %v1586, 1.0
    %v1588 = vmul.f32 %v1587, 0.5
    %v1589 = vsel %vm58, %v1586, %v1588
    %v1590 = vmul.f32 %v1589, %v1501
    %1592 = vrot.lane.b32.xlu0 %v1589, 64
    %v1593 = vpop.permute.xlu0 %1592
    %v1595 = vmul.f32 %v1589, %v1593
    %1597 = vrot.lane.b32.xlu0 %v1595, 32
    %v1598 = vpop.permute.xlu0 %1597
    %v1600 = vadd.f32 %v1590, %v1598
    %v1601 = vtanh.pop %v1600
    %1603 = vrot.lane.b32.xlu0 %v1601, 64
    %v1604 = vpop.permute.xlu0 %1603
    %v1606 = vmul.f32 %v1589, %v1604
    %v1607 = vld [vmem:[#allocation4 + $0x20] sm:$0xff]
    %1609 = vrot.lane.b32.xlu0 %v1606, 32
    %v1610 = vpop.permute.xlu0 %1609
    %v1611 = vsel %vm225, %v1610, 0
    %1613 = vmatprep.subr.mxu0 0.0
    %1614 = vmatpush1.msra.mxu0 %v1201
    %1615 = vmatprep.subr.mxu0 0.0
    %1616 = vmatpush1.msra.mxu0 %v1202
    %1617 = vmatprep.subr.mxu0 0.0
    %1618 = vmatpush1.msra.mxu0 %v1203
    %1619 = vmatprep.subr.mxu0 0.0
    %1620 = vmatpush1.msra.mxu0 %v1204
    %1621 = vmatprep.subr.mxu0 0.0
    %1622 = vmatpush1.msra.mxu0 0.0
    %1623 = vmatprep.subr.mxu0 0.0
    %1624 = vmatpush1.msra.mxu0 0.0
    %1625 = vmatprep.subr.mxu0 0.0
    %1626 = vmatpush1.msra.mxu0 0.0
    %1627 = vmatprep.subr.mxu0 0.0
    %1628 = vmatpush1.msra.mxu0 0.0
    %1629 = vmatprep.subr.mxu0 0.0
    %1630 = vmatpush1.msra.mxu0 0.0
    %1631 = vmatprep.subr.mxu0 0.0
    %1632 = vmatpush1.msra.mxu0 0.0
    %1633 = vmatprep.subr.mxu0 0.0
    %1634 = vmatpush1.msra.mxu0 0.0
    %1635 = vmatprep.subr.mxu0 0.0
    %1636 = vmatpush1.msra.mxu0 0.0
    %1637 = vmatprep.subr.mxu0 0.0
    %1638 = vmatpush1.msra.mxu0 0.0
    %1639 = vmatprep.subr.mxu0 0.0
    %1640 = vmatpush1.msra.mxu0 0.0
    %1641 = vmatprep.subr.mxu0 0.0
    %1642 = vmatpush1.msra.mxu0 0.0
    %1643 = vmatprep.subr.mxu0 0.0
    %1644 = vmatpush1.msra.mxu0 0.0
    %1645 = vmatprep.subr.mxu0 0.0
    %1646 = vmatpush1.msra.mxu0 0.0
    %1647 = vmatprep.subr.mxu0 0.0
    %1648 = vmatpush1.msra.mxu0 0.0
    %1649 = vmatprep.subr.mxu0 0.0
    %1650 = vmatpush1.msra.mxu0 0.0
    %1651 = vmatprep.subr.mxu0 0.0
    %1652 = vmatpush1.msra.mxu0 0.0
    %1653 = vmatprep.subr.mxu0 0.0
    %1654 = vmatpush1.msra.mxu0 0.0
    %1655 = vmatprep.subr.mxu0 0.0
    %1656 = vmatpush1.msra.mxu0 0.0
    %1657 = vmatprep.subr.mxu0 0.0
    %1658 = vmatpush1.msra.mxu0 0.0
    %1659 = vmatprep.subr.mxu0 0.0
    %1660 = vmatpush1.msra.mxu0 0.0
    %1661 = vmatprep.subr.mxu0 0.0
    %1662 = vmatpush1.msra.mxu0 0.0
    %1663 = vmatprep.subr.mxu0 0.0
    %1664 = vmatpush1.msra.mxu0 0.0
    %1665 = vmatprep.subr.mxu0 0.0
    %1666 = vmatpush1.msra.mxu0 0.0
    %1667 = vmatprep.subr.mxu0 0.0
    %1668 = vmatpush1.msra.mxu0 0.0
    %1669 = vmatprep.subr.mxu0 0.0
    %1670 = vmatpush1.msra.mxu0 0.0
    %1671 = vmatprep.subr.mxu0 0.0
    %1672 = vmatpush1.msra.mxu0 0.0
    %1673 = vmatprep.subr.mxu0 0.0
    %1674 = vmatpush1.msra.mxu0 0.0
    %1675 = vmatprep.subr.mxu0 0.0
    %1676 = vmatpush1.msra.mxu0 0.0
    %1677 = vmatprep.mubr.f32.mxu0 0.0
    %1678 = vmatmul.mubr.f32.gmra.mrb[0].mxu0 %v1611
    %v1679 = vpop.f32.mrb[0].mxu0
    %v1680 = vadd.f32 0.0, %v1679
    %v1681 = vpop.f32.mrb[0].mxu0
    %1682 = vdwg.mxu0
    %v1683 = vadd.f32 %v1607, %v1680
    %v1684 = vmul.f32 %v1683, %v59
    %v1685 = vtanh.pop %v1684
    %v1686 = vadd.f32 %v1685, 1.0
    %v1687 = vmul.f32 %v1686, 0.5
    %v1688 = vsel %vm58, %v1685, %v1687
    %v1689 = vmul.f32 %v1688, %v1600
    %1691 = vrot.lane.b32.xlu0 %v1688, 64
    %v1692 = vpop.permute.xlu0 %1691
    %v1694 = vmul.f32 %v1688, %v1692
    %1696 = vrot.lane.b32.xlu0 %v1694, 32
    %v1697 = vpop.permute.xlu0 %1696
    %v1699 = vadd.f32 %v1689, %v1697
    %v1700 = vtanh.pop %v1699
    %1702 = vrot.lane.b32.xlu0 %v1700, 64
    %v1703 = vpop.permute.xlu0 %1702
    %v1705 = vmul.f32 %v1688, %v1703
    %v1706 = vld [vmem:[#allocation4 + $0x28] sm:$0xff]
    %1708 = vrot.lane.b32.xlu0 %v1705, 32
    %v1709 = vpop.permute.xlu0 %1708
    %v1710 = vsel %vm225, %v1709, 0
    %1712 = vmatprep.subr.mxu0 0.0
    %1713 = vmatpush1.msra.mxu0 %v1201
    %1714 = vmatprep.subr.mxu0 0.0
    %1715 = vmatpush1.msra.mxu0 %v1202
    %1716 = vmatprep.subr.mxu0 0.0
    %1717 = vmatpush1.msra.mxu0 %v1203
    %1718 = vmatprep.subr.mxu0 0.0
    %1719 = vmatpush1.msra.mxu0 %v1204
    %1720 = vmatprep.subr.mxu0 0.0
    %1721 = vmatpush1.msra.mxu0 0.0
    %1722 = vmatprep.subr.mxu0 0.0
    %1723 = vmatpush1.msra.mxu0 0.0
    %1724 = vmatprep.subr.mxu0 0.0
    %1725 = vmatpush1.msra.mxu0 0.0
    %1726 = vmatprep.subr.mxu0 0.0
    %1727 = vmatpush1.msra.mxu0 0.0
    %1728 = vmatprep.subr.mxu0 0.0
    %1729 = vmatpush1.msra.mxu0 0.0
    %1730 = vmatprep.subr.mxu0 0.0
    %1731 = vmatpush1.msra.mxu0 0.0
    %1732 = vmatprep.subr.mxu0 0.0
    %1733 = vmatpush1.msra.mxu0 0.0
    %1734 = vmatprep.subr.mxu0 0.0
    %1735 = vmatpush1.msra.mxu0 0.0
    %1736 = vmatprep.subr.mxu0 0.0
    %1737 = vmatpush1.msra.mxu0 0.0
    %1738 = vmatprep.subr.mxu0 0.0
    %1739 = vmatpush1.msra.mxu0 0.0
    %1740 = vmatprep.subr.mxu0 0.0
    %1741 = vmatpush1.msra.mxu0 0.0
    %1742 = vmatprep.subr.mxu0 0.0
    %1743 = vmatpush1.msra.mxu0 0.0
    %1744 = vmatprep.subr.mxu0 0.0
    %1745 = vmatpush1.msra.mxu0 0.0
    %1746 = vmatprep.subr.mxu0 0.0
    %1747 = vmatpush1.msra.mxu0 0.0
    %1748 = vmatprep.subr.mxu0 0.0
    %1749 = vmatpush1.msra.mxu0 0.0
    %1750 = vmatprep.subr.mxu0 0.0
    %1751 = vmatpush1.msra.mxu0 0.0
    %1752 = vmatprep.subr.mxu0 0.0
    %1753 = vmatpush1.msra.mxu0 0.0
    %1754 = vmatprep.subr.mxu0 0.0
    %1755 = vmatpush1.msra.mxu0 0.0
    %1756 = vmatprep.subr.mxu0 0.0
    %1757 = vmatpush1.msra.mxu0 0.0
    %1758 = vmatprep.subr.mxu0 0.0
    %1759 = vmatpush1.msra.mxu0 0.0
    %1760 = vmatprep.subr.mxu0 0.0
    %1761 = vmatpush1.msra.mxu0 0.0
    %1762 = vmatprep.subr.mxu0 0.0
    %1763 = vmatpush1.msra.mxu0 0.0
    %1764 = vmatprep.subr.mxu0 0.0
    %1765 = vmatpush1.msra.mxu0 0.0
    %1766 = vmatprep.subr.mxu0 0.0
    %1767 = vmatpush1.msra.mxu0 0.0
    %1768 = vmatprep.subr.mxu0 0.0
    %1769 = vmatpush1.msra.mxu0 0.0
    %1770 = vmatprep.subr.mxu0 0.0
    %1771 = vmatpush1.msra.mxu0 0.0
    %1772 = vmatprep.subr.mxu0 0.0
    %1773 = vmatpush1.msra.mxu0 0.0
    %1774 = vmatprep.subr.mxu0 0.0
    %1775 = vmatpush1.msra.mxu0 0.0
    %1776 = vmatprep.mubr.f32.mxu0 0.0
    %1777 = vmatmul.mubr.f32.gmra.mrb[0].mxu0 %v1710
    %v1778 = vpop.f32.mrb[0].mxu0
    %v1779 = vadd.f32 0.0, %v1778
    %v1780 = vpop.f32.mrb[0].mxu0
    %1781 = vdwg.mxu0
    %v1782 = vadd.f32 %v1706, %v1779
    %v1783 = vmul.f32 %v1782, %v59
    %v1784 = vtanh.pop %v1783
    %v1785 = vadd.f32 %v1784, 1.0
    %v1786 = vmul.f32 %v1785, 0.5
    %v1787 = vsel %vm58, %v1784, %v1786
    %v1788 = vmul.f32 %v1787, %v1699
    %1790 = vrot.lane.b32.xlu0 %v1787, 64
    %v1791 = vpop.permute.xlu0 %1790
    %v1793 = vmul.f32 %v1787, %v1791
    %1795 = vrot.lane.b32.xlu0 %v1793, 32
    %v1796 = vpop.permute.xlu0 %1795
    %v1798 = vadd.f32 %v1788, %v1796
    %v1799 = vtanh.pop %v1798
    %1801 = vrot.lane.b32.xlu0 %v1799, 64
    %v1802 = vpop.permute.xlu0 %1801
    %v1804 = vmul.f32 %v1787, %v1802
    %v1805 = vld [vmem:[#allocation4 + $0x30] sm:$0xff]
    %1807 = vrot.lane.b32.xlu0 %v1804, 32
    %v1808 = vpop.permute.xlu0 %1807
    %v1809 = vsel %vm225, %v1808, 0
    %1811 = vmatprep.subr.mxu0 0.0
    %1812 = vmatpush1.msra.mxu0 %v1201
    %1813 = vmatprep.subr.mxu0 0.0
    %1814 = vmatpush1.msra.mxu0 %v1202
    %1815 = vmatprep.subr.mxu0 0.0
    %1816 = vmatpush1.msra.mxu0 %v1203
    %1817 = vmatprep.subr.mxu0 0.0
    %1818 = vmatpush1.msra.mxu0 %v1204
    %1819 = vmatprep.subr.mxu0 0.0
    %1820 = vmatpush1.msra.mxu0 0.0
    %1821 = vmatprep.subr.mxu0 0.0
    %1822 = vmatpush1.msra.mxu0 0.0
    %1823 = vmatprep.subr.mxu0 0.0
    %1824 = vmatpush1.msra.mxu0 0.0
    %1825 = vmatprep.subr.mxu0 0.0
    %1826 = vmatpush1.msra.mxu0 0.0
    %1827 = vmatprep.subr.mxu0 0.0
    %1828 = vmatpush1.msra.mxu0 0.0
    %1829 = vmatprep.subr.mxu0 0.0
    %1830 = vmatpush1.msra.mxu0 0.0
    %1831 = vmatprep.subr.mxu0 0.0
    %1832 = vmatpush1.msra.mxu0 0.0
    %1833 = vmatprep.subr.mxu0 0.0
    %1834 = vmatpush1.msra.mxu0 0.0
    %1835 = vmatprep.subr.mxu0 0.0
    %1836 = vmatpush1.msra.mxu0 0.0
    %1837 = vmatprep.subr.mxu0 0.0
    %1838 = vmatpush1.msra.mxu0 0.0
    %1839 = vmatprep.subr.mxu0 0.0
    %1840 = vmatpush1.msra.mxu0 0.0
    %1841 = vmatprep.subr.mxu0 0.0
    %1842 = vmatpush1.msra.mxu0 0.0
    %1843 = vmatprep.subr.mxu0 0.0
    %1844 = vmatpush1.msra.mxu0 0.0
    %1845 = vmatprep.subr.mxu0 0.0
    %1846 = vmatpush1.msra.mxu0 0.0
    %1847 = vmatprep.subr.mxu0 0.0
    %1848 = vmatpush1.msra.mxu0 0.0
    %1849 = vmatprep.subr.mxu0 0.0
    %1850 = vmatpush1.msra.mxu0 0.0
    %1851 = vmatprep.subr.mxu0 0.0
    %1852 = vmatpush1.msra.mxu0 0.0
    %1853 = vmatprep.subr.mxu0 0.0
    %1854 = vmatpush1.msra.mxu0 0.0
    %1855 = vmatprep.subr.mxu0 0.0
    %1856 = vmatpush1.msra.mxu0 0.0
    %1857 = vmatprep.subr.mxu0 0.0
    %1858 = vmatpush1.msra.mxu0 0.0
    %1859 = vmatprep.subr.mxu0 0.0
    %1860 = vmatpush1.msra.mxu0 0.0
    %1861 = vmatprep.subr.mxu0 0.0
    %1862 = vmatpush1.msra.mxu0 0.0
    %1863 = vmatprep.subr.mxu0 0.0
    %1864 = vmatpush1.msra.mxu0 0.0
    %1865 = vmatprep.subr.mxu0 0.0
    %1866 = vmatpush1.msra.mxu0 0.0
    %1867 = vmatprep.subr.mxu0 0.0
    %1868 = vmatpush1.msra.mxu0 0.0
    %1869 = vmatprep.subr.mxu0 0.0
    %1870 = vmatpush1.msra.mxu0 0.0
    %1871 = vmatprep.subr.mxu0 0.0
    %1872 = vmatpush1.msra.mxu0 0.0
    %1873 = vmatprep.subr.mxu0 0.0
    %1874 = vmatpush1.msra.mxu0 0.0
    %1875 = vmatprep.mubr.f32.mxu0 0.0
    %1876 = vmatmul.mubr.f32.gmra.mrb[0].mxu0 %v1809
    %v1877 = vpop.f32.mrb[0].mxu0
    %v1878 = vadd.f32 0.0, %v1877
    %v1879 = vpop.f32.mrb[0].mxu0
    %1880 = vdwg.mxu0
    %v1881 = vadd.f32 %v1805, %v1878
    %v1882 = vmul.f32 %v1881, %v59
    %v1883 = vtanh.pop %v1882
    %v1884 = vadd.f32 %v1883, 1.0
    %v1885 = vmul.f32 %v1884, 0.5
    %v1886 = vsel %vm58, %v1883, %v1885
    %v1887 = vmul.f32 %v1886, %v1798
    %1889 = vrot.lane.b32.xlu0 %v1886, 64
    %v1890 = vpop.permute.xlu0 %1889
    %v1892 = vmul.f32 %v1886, %v1890
    %1894 = vrot.lane.b32.xlu0 %v1892, 32
    %v1895 = vpop.permute.xlu0 %1894
    %v1897 = vadd.f32 %v1887, %v1895
    %v1898 = vtanh.pop %v1897
    %1900 = vrot.lane.b32.xlu0 %v1898, 64
    %v1901 = vpop.permute.xlu0 %1900
    %v1903 = vmul.f32 %v1886, %v1901
    %v1904 = vld [vmem:[#allocation4 + $0x38] sm:$0xff]
    %1906 = vrot.lane.b32.xlu0 %v1903, 32
    %v1907 = vpop.permute.xlu0 %1906
    %v1908 = vsel %vm225, %v1907, 0
    %1910 = vmatprep.subr.mxu0 0.0
    %1911 = vmatpush1.msra.mxu0 %v1201
    %1912 = vmatprep.subr.mxu0 0.0
    %1913 = vmatpush1.msra.mxu0 %v1202
    %1914 = vmatprep.subr.mxu0 0.0
    %1915 = vmatpush1.msra.mxu0 %v1203
    %1916 = vmatprep.subr.mxu0 0.0
    %1917 = vmatpush1.msra.mxu0 %v1204
    %1918 = vmatprep.subr.mxu0 0.0
    %1919 = vmatpush1.msra.mxu0 0.0
    %1920 = vmatprep.subr.mxu0 0.0
    %1921 = vmatpush1.msra.mxu0 0.0
    %1922 = vmatprep.subr.mxu0 0.0
    %1923 = vmatpush1.msra.mxu0 0.0
    %1924 = vmatprep.subr.mxu0 0.0
    %1925 = vmatpush1.msra.mxu0 0.0
    %1926 = vmatprep.subr.mxu0 0.0
    %1927 = vmatpush1.msra.mxu0 0.0
    %1928 = vmatprep.subr.mxu0 0.0
    %1929 = vmatpush1.msra.mxu0 0.0
    %1930 = vmatprep.subr.mxu0 0.0
    %1931 = vmatpush1.msra.mxu0 0.0
    %1932 = vmatprep.subr.mxu0 0.0
    %1933 = vmatpush1.msra.mxu0 0.0
    %1934 = vmatprep.subr.mxu0 0.0
    %1935 = vmatpush1.msra.mxu0 0.0
    %1936 = vmatprep.subr.mxu0 0.0
    %1937 = vmatpush1.msra.mxu0 0.0
    %1938 = vmatprep.subr.mxu0 0.0
    %1939 = vmatpush1.msra.mxu0 0.0
    %1940 = vmatprep.subr.mxu0 0.0
    %1941 = vmatpush1.msra.mxu0 0.0
    %1942 = vmatprep.subr.mxu0 0.0
    %1943 = vmatpush1.msra.mxu0 0.0
    %1944 = vmatprep.subr.mxu0 0.0
    %1945 = vmatpush1.msra.mxu0 0.0
    %1946 = vmatprep.subr.mxu0 0.0
    %1947 = vmatpush1.msra.mxu0 0.0
    %1948 = vmatprep.subr.mxu0 0.0
    %1949 = vmatpush1.msra.mxu0 0.0
    %1950 = vmatprep.subr.mxu0 0.0
    %1951 = vmatpush1.msra.mxu0 0.0
    %1952 = vmatprep.subr.mxu0 0.0
    %1953 = vmatpush1.msra.mxu0 0.0
    %1954 = vmatprep.subr.mxu0 0.0
    %1955 = vmatpush1.msra.mxu0 0.0
    %1956 = vmatprep.subr.mxu0 0.0
    %1957 = vmatpush1.msra.mxu0 0.0
    %1958 = vmatprep.subr.mxu0 0.0
    %1959 = vmatpush1.msra.mxu0 0.0
    %1960 = vmatprep.subr.mxu0 0.0
    %1961 = vmatpush1.msra.mxu0 0.0
    %1962 = vmatprep.subr.mxu0 0.0
    %1963 = vmatpush1.msra.mxu0 0.0
    %1964 = vmatprep.subr.mxu0 0.0
    %1965 = vmatpush1.msra.mxu0 0.0
    %1966 = vmatprep.subr.mxu0 0.0
    %1967 = vmatpush1.msra.mxu0 0.0
    %1968 = vmatprep.subr.mxu0 0.0
    %1969 = vmatpush1.msra.mxu0 0.0
    %1970 = vmatprep.subr.mxu0 0.0
    %1971 = vmatpush1.msra.mxu0 0.0
    %1972 = vmatprep.subr.mxu0 0.0
    %1973 = vmatpush1.msra.mxu0 0.0
    %1974 = vmatprep.mubr.f32.mxu0 0.0
    %1975 = vmatmul.mubr.f32.gmra.mrb[0].mxu0 %v1908
    %v1976 = vpop.f32.mrb[0].mxu0
    %v1977 = vadd.f32 0.0, %v1976
    %v1978 = vpop.f32.mrb[0].mxu0
    %1979 = vdwg.mxu0
    %v1980 = vadd.f32 %v1904, %v1977
    %v1981 = vmul.f32 %v1980, %v59
    %v1982 = vtanh.pop %v1981
    %v1983 = vadd.f32 %v1982, 1.0
    %v1984 = vmul.f32 %v1983, 0.5
    %v1985 = vsel %vm58, %v1982, %v1984
    %v1986 = vmul.f32 %v1985, %v1897
    %1988 = vrot.lane.b32.xlu0 %v1985, 64
    %v1989 = vpop.permute.xlu0 %1988
    %v1991 = vmul.f32 %v1985, %v1989
    %1993 = vrot.lane.b32.xlu0 %v1991, 32
    %v1994 = vpop.permute.xlu0 %1993
    %v1996 = vadd.f32 %v1986, %v1994
    %v1997 = vtanh.pop %v1996
    %1999 = vrot.lane.b32.xlu0 %v1997, 64
    %v2000 = vpop.permute.xlu0 %1999
    %v2002 = vmul.f32 %v1985, %v2000
    %2004 = vrot.lane.b32.xlu0 %v2002, 32
    %v2005 = vpop.permute.xlu0 %2004
    %2007 = vst.msk [vmem:[%s1205] sm:$0xff] %vm225, %v2005
    %2009 = vrot.lane.b32.xlu0 %v1996, 96
    %v2010 = vpop.permute.xlu0 %2009
    %2012 = vst.msk [vmem:[%s1207] sm:$0xff] %vm225, %v2010
    // Predicated region
    $region42: #{tpu_custom_call.1} parent=1 // pred_check
      %p2013 = pneg %p45
    $region43: #{tpu_custom_call.1} parent=1 // pred_check_branch
      %2015 = sbr.rel (%p2013) target = $region45
    $region44: #{tpu_custom_call.1} parent=1 // pred_region
      %v2016 = vld [vmem:[%s6] sm:$0x1]
      %v2018 = vlaneseq
      %v2019 = vshrl.u32 %v2018, 7
      %v2020 = vsub.s32 0, %v2019
      %v2021 = vrot.slane %v2016, %v2020
      %2022 = vrot.lane.b32.xlu0 %v2021, 96
      %v2023 = vpop.permute.xlu0 %2022
      %v2025 = vmul.f32 %v2002, %v2023
      %2027 = vrot.lane.b32.xlu0 %v2025, 32
      %v2028 = vpop.permute.xlu0 %2027
      %v2030 = vsel %vm225, %v2028, 0.0
      %2031 = vadd.xlane.f32.xlu0 %v2030
      %v2032 = vpop.xlane.xlu0 %2031
      %v2033 = vld [vmem:[#allocation6] sm:$0x1]
      %v2035 = vlaneseq
      %v2036 = vshrl.u32 %v2035, 7
      %v2037 = vsub.s32 0, %v2036
      %v2038 = vrot.slane %v2033, %v2037
      %v2040 = vadd.f32 %v2032, %v2038
      %v2041 = vmax.f32 %v2040, 0.0
      %vm2042 = vcmask 7168
      %2043 = vst.msk [vmem:[%s8] sm:$0xff] %vm2042, %v2041
    $region45: #{tpu_custom_call.1} parent=1 // pred_fallthru
      _
    // Predicated region
    $region46: #{tpu_custom_call.1} parent=1 // pred_check
      _
    $region47: #{tpu_custom_call.1} parent=1 // pred_check_branch
      %2045 = sbr.rel (0) target = $region49
    $region48: #{tpu_custom_call.1} parent=1 // pred_region
      _
    $region49: #{tpu_custom_call.1} parent=1 // pred_fallthru
      _
    // Predicated region
    $region50: #{tpu_custom_call.1} parent=1 // pred_check
      _
    $region51: #{tpu_custom_call.1} parent=1 // pred_check_branch
      %2047 = sbr.rel (0) target = $region53
    $region52: #{tpu_custom_call.1} parent=1 // pred_region
      _
    $region53: #{tpu_custom_call.1} parent=1 // pred_fallthru
      _
    %2048 = vsyncpa [#allocation8], 1

</llo_original>
